<compile_context>
chip_gen: v7x
topology: tpu7x:2x2x1
jax: 0.10.0
libtpu: 0.0.40
codegen_flags: <defaults>
</compile_context>

<pallas_src>
import functools
import jax
import jax.numpy as jnp
from jax import lax
from jax.experimental import pallas as pl
from jax.experimental.pallas import tpu as pltpu

NUM_LAYERS = 2          # >= 2 required by the module
EMB_DIM = 81            # must equal the hard-coded 81 for residual to be well-formed
EDGE_DIM = 6            # mmm = 6
NUM_TASKS = 1
BN_EPS = 1e-5

F_PAD = 128             # lane-padded feature width
T_PAD = 128             # lane-padded head-output width (sliced back to NUM_TASKS)
MXU_DTYPE = jnp.bfloat16  # dtype of the 0/1-mask matmuls; jnp.float32 -> bit-exact f32


# ----------------------------- fused Pallas kernel -----------------------------

def fused_gin_kernel(ope_ref,                                   # SMEM (L,): 1 + eps
                     x_ref, src_ref, dst_ref, batch_ref, ea_ref,
                     WeT_ref, be_ref, W1T_ref, b1_ref, g1_ref, beta1_ref,
                     W2T_ref, b2_ref, scale_ref, shift_ref,
                     WpT_ref, bp_ref,
                     out_ref, *, num_layers):
    E = ea_ref.shape[0]
    N = x_ref.shape[0]
    G = out_ref.shape[0]

    # --- build 0/1 gather / scatter / pool masks in-kernel (no dense HBM adjacency) ---
    # S[e, n] = (src[e] == n)   : gather  x_j = h[src[e]]
    # T[n, e] = (dst[e] == n)   : scatter-add into destination nodes (built already
    #                             transposed -> no transpose anywhere)
    # P[g, n] = (batch[n] == g) : global_add_pool
    # Built once, reused by every layer.
    S = (src_ref[...] == lax.broadcasted_iota(jnp.int32, (E, N), 1)).astype(MXU_DTYPE)
    T = (dst_ref[...] == lax.broadcasted_iota(jnp.int32, (N, E), 0)).astype(MXU_DTYPE)
    P = (batch_ref[...] == lax.broadcasted_iota(jnp.int32, (G, N), 0)).astype(MXU_DTYPE)

    ones_row = jnp.ones((1, N), jnp.float32)   # MXU-based column mean (not XLU reduce)
    inv_n = 1.0 / N

    h = x_ref[...]                                                       # (N, F) f32
    for l in range(num_layers):                                          # static unroll
        # --- GINEConv message passing ---
        edge_emb = jnp.dot(ea_ref[...], WeT_ref[l],
                           preferred_element_type=jnp.float32) + be_ref[l]       # (E, F)
        x_src = jnp.dot(S, h.astype(MXU_DTYPE),
                        preferred_element_type=jnp.float32)                      # (E, F)
        msg = jnp.maximum(x_src + edge_emb, 0.0)                                 # relu(x_j + e)
        agg = jnp.dot(T, msg.astype(MXU_DTYPE),
                      preferred_element_type=jnp.float32)                        # (N, F)
        out = agg + ope_ref[l] * h                                               # +(1+eps)*x_i

        # --- conv MLP: Linear -> BatchNorm1d(batch stats) -> ReLU -> Linear -> ReLU ---
        z1 = jnp.dot(out, W1T_ref[l], preferred_element_type=jnp.float32) + b1_ref[l]
        mu = jnp.dot(ones_row, z1, preferred_element_type=jnp.float32) * inv_n   # (1, F)
        d = z1 - mu
        var = jnp.dot(ones_row, d * d, preferred_element_type=jnp.float32) * inv_n
        z1 = d * lax.rsqrt(var + BN_EPS) * g1_ref[l] + beta1_ref[l]
        z1 = jnp.maximum(z1, 0.0)
        z2 = jnp.dot(z1, W2T_ref[l], preferred_element_type=jnp.float32) + b2_ref[l]
        z2 = jnp.maximum(z2, 0.0)

        # --- outer BatchNorm1d (eval, running stats) pre-folded to scale/shift ---
        hb = z2 * scale_ref[l] + shift_ref[l]

        # --- ReLU on non-final layers; dropout is identity in eval; residual add ---
        if l != num_layers - 1:
            hb = jnp.maximum(hb, 0.0)
        h = hb + h

    # --- JK='last' -> global_add_pool -> Linear -> clamp(0, 50) (eval path) ---
    hg = jnp.dot(P, h.astype(MXU_DTYPE), preferred_element_type=jnp.float32)     # (G, F)
    y = jnp.dot(hg, WpT_ref[...], preferred_element_type=jnp.float32) + bp_ref[...]
    out_ref[...] = jnp.clip(y, 0.0, 50.0)


# ------------------------------ wrapper -----------------------------------

_VMEM = pl.BlockSpec(memory_space=pltpu.MemorySpace.VMEM)
_SMEM = pl.BlockSpec(memory_space=pltpu.MemorySpace.SMEM)


def gin_graph_pooling_forward(x, edge_index, edge_attr, batch, num_graphs, pp):
    n = x.shape[0]
    assert x.shape[1] == EMB_DIM
    # x.to(torch.int64): integer node features, promoted to float in the arithmetic.
    x_pad = jnp.zeros((n, F_PAD), jnp.float32).at[:, :EMB_DIM].set(x.astype(jnp.float32))
    src_col = edge_index[0].astype(jnp.int32).reshape(-1, 1)    # (E, 1)
    dst_row = edge_index[1].astype(jnp.int32).reshape(1, -1)    # (1, E)
    batch_row = batch.astype(jnp.int32).reshape(1, -1)          # (1, N)

    kernel = functools.partial(fused_gin_kernel, num_layers=NUM_LAYERS)
    # TODO(synk): for graphs too large for whole-array VMEM residency (esp. v7x's 64 MiB),
    # tile the edge/node axes with a ('parallel', 'arbitrary') grid plus cross-tile
    # accumulators for the batch-stat BN and the sum-pool.
    out = pl.pallas_call(
        kernel,
        out_shape=jax.ShapeDtypeStruct((num_graphs, T_PAD), jnp.float32),
        in_specs=[_SMEM] + [_VMEM] * 17,
        out_specs=_VMEM,
    )(pp["ope"], x_pad, src_col, dst_row, batch_row, edge_attr,
      pp["WeT"], pp["be"], pp["W1T"], pp["b1"], pp["g1"], pp["beta1"],
      pp["W2T"], pp["b2"], pp["scale"], pp["shift"],
      pp["WpT"], pp["bp"])
    return out[:, :NUM_TASKS]


# --------------------------- parameters --------------------------------

def init_params(key):
    params = {"layers": []}
    for _ in range(NUM_LAYERS):
        key, *ks = jax.random.split(key, 6)
        lp = {
            "WeT":   0.1 * jax.random.normal(ks[0], (EDGE_DIM, EMB_DIM), jnp.float32),
            "be":    0.1 * jax.random.normal(ks[1], (1, EMB_DIM), jnp.float32),
            "eps":   jnp.zeros((), jnp.float32),                 # train_eps init = 0
            "W1T":   0.1 * jax.random.normal(ks[2], (EMB_DIM, EMB_DIM), jnp.float32),
            "b1":    0.1 * jax.random.normal(ks[3], (1, EMB_DIM), jnp.float32),
            "g1":    jnp.ones((1, EMB_DIM), jnp.float32),
            "beta1": jnp.zeros((1, EMB_DIM), jnp.float32),
            "W2T":   0.1 * jax.random.normal(ks[4], (EMB_DIM, EMB_DIM), jnp.float32),
            "b2":    jnp.zeros((1, EMB_DIM), jnp.float32),
            "gamma": jnp.ones((1, EMB_DIM), jnp.float32),        # outer BN (running stats)
            "beta":  jnp.zeros((1, EMB_DIM), jnp.float32),
            "rm":    jnp.zeros((1, EMB_DIM), jnp.float32),
            "rv":    jnp.ones((1, EMB_DIM), jnp.float32),
        }
        params["layers"].append(lp)
    key, k1, k2 = jax.random.split(key, 3)
    params["WpT"] = 0.1 * jax.random.normal(k1, (EMB_DIM, NUM_TASKS), jnp.float32)
    params["bp"] = 0.1 * jax.random.normal(k2, (1, NUM_TASKS), jnp.float32)
    return params


def _pad2(a, rows, cols):
    return jnp.pad(a, ((0, rows - a.shape[0]), (0, cols - a.shape[1])))


def prepare_params(params):
    """Lane-pad to 128, fold eval-mode outer BN to (scale, shift), fold (1 + eps) to a
    1-D SMEM scalar per layer, and stack per-layer tensors along a leading layer axis."""
    stk = lambda name, rows: jnp.stack(
        [_pad2(lp[name], rows, F_PAD) for lp in params["layers"]])
    pp = {
        "WeT":   stk("WeT", EDGE_DIM),
        "be":    stk("be", 1),
        "W1T":   stk("W1T", F_PAD),
        "b1":    stk("b1", 1),
        "g1":    stk("g1", 1),
        "beta1": stk("beta1", 1),
        "W2T":   stk("W2T", F_PAD),
        "b2":    stk("b2", 1),
    }
    scales, shifts = [], []
    for lp in params["layers"]:
        s = lp["gamma"] * lax.rsqrt(lp["rv"] + BN_EPS)     # eval BN: y = x * s + c
        c = lp["beta"] - lp["rm"] * s
        scales.append(_pad2(s, 1, F_PAD))
        shifts.append(_pad2(c, 1, F_PAD))
    pp["scale"] = jnp.stack(scales)
    pp["shift"] = jnp.stack(shifts)
    pp["ope"] = jnp.stack([1.0 + lp["eps"] for lp in params["layers"]]
                          ).reshape(NUM_LAYERS).astype(jnp.float32)   # 1-D SMEM
    pp["WpT"] = _pad2(params["WpT"], F_PAD, T_PAD)
    pp["bp"] = _pad2(params["bp"], 1, T_PAD)
    return pp


# --------------------------------- main -------------------------------------

if __name__ == "__main__":
    N, E, G = 32, 64, 2
    key = jax.random.PRNGKey(0)
    kx, ks, kd, ke, kp = jax.random.split(key, 5)

    x = jax.random.randint(kx, (N, EMB_DIM), 0, 4, dtype=jnp.int32)   # integer node feats
    src = jax.random.randint(ks, (E,), 0, N, dtype=jnp.int32)
    dst = jax.random.randint(kd, (E,), 0, N, dtype=jnp.int32)
    edge_index = jnp.stack([src, dst], axis=0)                        # (2, E)
    edge_attr = jax.random.normal(ke, (E, EDGE_DIM), jnp.float32)     # (E, 6)
    batch = jnp.concatenate([jnp.zeros((N // 2,), jnp.int32),
                             jnp.ones((N - N // 2,), jnp.int32)])     # (N,)

    pp = prepare_params(init_params(kp))

    out = gin_graph_pooling_forward(x, edge_index, edge_attr, batch, G, pp)
    out = jax.block_until_ready(out)
    assert out.shape == (G, NUM_TASKS)
    print("KERNEL_OK")
</pallas_src>

<mosaic_0001>
module attributes {stable_mosaic.version = 11 : i64} {
  func.func @fused_gin_kernel(%arg0: memref<2xf32, #tpu.memory_space<smem>>, %arg1: memref<32x128xf32, #tpu.memory_space<vmem>>, %arg2: memref<64x1xi32, #tpu.memory_space<vmem>>, %arg3: memref<1x64xi32, #tpu.memory_space<vmem>>, %arg4: memref<1x32xi32, #tpu.memory_space<vmem>>, %arg5: memref<64x6xf32, #tpu.memory_space<vmem>>, %arg6: memref<2x6x128xf32, #tpu.memory_space<vmem>>, %arg7: memref<2x1x128xf32, #tpu.memory_space<vmem>>, %arg8: memref<2x128x128xf32, #tpu.memory_space<vmem>>, %arg9: memref<2x1x128xf32, #tpu.memory_space<vmem>>, %arg10: memref<2x1x128xf32, #tpu.memory_space<vmem>>, %arg11: memref<2x1x128xf32, #tpu.memory_space<vmem>>, %arg12: memref<2x128x128xf32, #tpu.memory_space<vmem>>, %arg13: memref<2x1x128xf32, #tpu.memory_space<vmem>>, %arg14: memref<2x1x128xf32, #tpu.memory_space<vmem>>, %arg15: memref<2x1x128xf32, #tpu.memory_space<vmem>>, %arg16: memref<128x128xf32, #tpu.memory_space<vmem>>, %arg17: memref<1x128xf32, #tpu.memory_space<vmem>>, %arg18: memref<2x128xf32, #tpu.memory_space<vmem>>) attributes {dimension_semantics = [], scalar_prefetch = 0 : i64, scratch_operands = 0 : i64, tpu.core_type = #tpu.core_type<tc>} {
    %c0 = arith.constant 0 : index
    %c0_0 = arith.constant 0 : index
    %0 = vector.load %arg2[%c0, %c0_0] : memref<64x1xi32, #tpu.memory_space<vmem>>, vector<64x1xi32>
    %1 = tpu.iota {dimensions = array<i32: 1>} : vector<64x32xi32>
    %2 = vector.broadcast %0 : vector<64x1xi32> to vector<64x32xi32>
    %3 = arith.cmpi eq, %2, %1 : vector<64x32xi32>
    %4 = arith.extui %3 : vector<64x32xi1> to vector<64x32xi32>
    %5 = arith.sitofp %4 : vector<64x32xi32> to vector<64x32xf32>
    %6 = arith.truncf %5 : vector<64x32xf32> to vector<64x32xbf16>
    %c0_1 = arith.constant 0 : index
    %c0_2 = arith.constant 0 : index
    %7 = vector.load %arg3[%c0_1, %c0_2] : memref<1x64xi32, #tpu.memory_space<vmem>>, vector<1x64xi32>
    %8 = tpu.iota {dimensions = array<i32: 0>} : vector<32x64xi32>
    %9 = vector.broadcast %7 : vector<1x64xi32> to vector<32x64xi32>
    %10 = arith.cmpi eq, %9, %8 : vector<32x64xi32>
    %11 = arith.extui %10 : vector<32x64xi1> to vector<32x64xi32>
    %12 = arith.sitofp %11 : vector<32x64xi32> to vector<32x64xf32>
    %13 = arith.truncf %12 : vector<32x64xf32> to vector<32x64xbf16>
    %c0_3 = arith.constant 0 : index
    %c0_4 = arith.constant 0 : index
    %14 = vector.load %arg4[%c0_3, %c0_4] : memref<1x32xi32, #tpu.memory_space<vmem>>, vector<1x32xi32>
    %15 = tpu.iota {dimensions = array<i32: 0>} : vector<2x32xi32>
    %16 = vector.broadcast %14 : vector<1x32xi32> to vector<2x32xi32>
    %17 = arith.cmpi eq, %16, %15 : vector<2x32xi32>
    %18 = arith.extui %17 : vector<2x32xi1> to vector<2x32xi32>
    %19 = arith.sitofp %18 : vector<2x32xi32> to vector<2x32xf32>
    %20 = arith.truncf %19 : vector<2x32xf32> to vector<2x32xbf16>
    %cst = arith.constant 1.000000e+00 : f32
    %21 = vector.broadcast %cst : f32 to vector<1x32xf32>
    %c0_5 = arith.constant 0 : index
    %c0_6 = arith.constant 0 : index
    %22 = vector.load %arg1[%c0_5, %c0_6] : memref<32x128xf32, #tpu.memory_space<vmem>>, vector<32x128xf32>
    %c0_7 = arith.constant 0 : index
    %c0_8 = arith.constant 0 : index
    %23 = vector.load %arg5[%c0_7, %c0_8] : memref<64x6xf32, #tpu.memory_space<vmem>>, vector<64x6xf32>
    %c0_9 = arith.constant 0 : index
    %c0_10 = arith.constant 0 : index
    %c0_11 = arith.constant 0 : index
    %24 = vector.load %arg6[%c0_9, %c0_10, %c0_11] : memref<2x6x128xf32, #tpu.memory_space<vmem>>, vector<1x6x128xf32>
    %25 = vector.shape_cast %24 : vector<1x6x128xf32> to vector<6x128xf32>
    %cst_12 = arith.constant dense<0.000000e+00> : vector<64x128xf32>
    %26 = tpu.matmul %23, %25, %cst_12 {dimension_numbers = #tpu.dot_dimension_numbers<[1], [0], [0], [1], [0, 0, 1, 1], [], []>} : vector<64x6xf32>, vector<6x128xf32>, vector<64x128xf32> -> vector<64x128xf32>
    %c0_13 = arith.constant 0 : index
    %c0_14 = arith.constant 0 : index
    %c0_15 = arith.constant 0 : index
    %27 = vector.load %arg7[%c0_13, %c0_14, %c0_15] : memref<2x1x128xf32, #tpu.memory_space<vmem>>, vector<1x1x128xf32>
    %28 = vector.shape_cast %27 : vector<1x1x128xf32> to vector<1x128xf32>
    %29 = vector.broadcast %28 : vector<1x128xf32> to vector<64x128xf32>
    %30 = arith.addf %26, %29 : vector<64x128xf32>
    %31 = arith.truncf %22 : vector<32x128xf32> to vector<32x128xbf16>
    %cst_16 = arith.constant dense<0.000000e+00> : vector<64x128xf32>
    %32 = tpu.matmul %6, %31, %cst_16 {dimension_numbers = #tpu.dot_dimension_numbers<[1], [0], [0], [1], [0, 0, 1, 1], [], []>} : vector<64x32xbf16>, vector<32x128xbf16>, vector<64x128xf32> -> vector<64x128xf32>
    %33 = arith.addf %32, %30 : vector<64x128xf32>
    %cst_17 = arith.constant 0.000000e+00 : f32
    %34 = vector.broadcast %cst_17 : f32 to vector<64x128xf32>
    %35 = arith.maximumf %33, %34 : vector<64x128xf32>
    %36 = arith.truncf %35 : vector<64x128xf32> to vector<64x128xbf16>
    %cst_18 = arith.constant dense<0.000000e+00> : vector<32x128xf32>
    %37 = tpu.matmul %13, %36, %cst_18 {dimension_numbers = #tpu.dot_dimension_numbers<[1], [0], [0], [1], [0, 0, 1, 1], [], []>} : vector<32x64xbf16>, vector<64x128xbf16>, vector<32x128xf32> -> vector<32x128xf32>
    %c0_19 = arith.constant 0 : index
    %38 = memref.load %arg0[%c0_19] : memref<2xf32, #tpu.memory_space<smem>>
    %39 = vector.broadcast %38 : f32 to vector<32x128xf32>
    %40 = arith.mulf %39, %22 : vector<32x128xf32>
    %41 = arith.addf %37, %40 : vector<32x128xf32>
    %c0_20 = arith.constant 0 : index
    %c0_21 = arith.constant 0 : index
    %c0_22 = arith.constant 0 : index
    %42 = vector.load %arg8[%c0_20, %c0_21, %c0_22] : memref<2x128x128xf32, #tpu.memory_space<vmem>>, vector<1x128x128xf32>
    %43 = vector.shape_cast %42 : vector<1x128x128xf32> to vector<128x128xf32>
    %cst_23 = arith.constant dense<0.000000e+00> : vector<32x128xf32>
    %44 = tpu.matmul %41, %43, %cst_23 {dimension_numbers = #tpu.dot_dimension_numbers<[1], [0], [0], [1], [0, 0, 1, 1], [], []>} : vector<32x128xf32>, vector<128x128xf32>, vector<32x128xf32> -> vector<32x128xf32>
    %c0_24 = arith.constant 0 : index
    %c0_25 = arith.constant 0 : index
    %c0_26 = arith.constant 0 : index
    %45 = vector.load %arg9[%c0_24, %c0_25, %c0_26] : memref<2x1x128xf32, #tpu.memory_space<vmem>>, vector<1x1x128xf32>
    %46 = vector.shape_cast %45 : vector<1x1x128xf32> to vector<1x128xf32>
    %47 = vector.broadcast %46 : vector<1x128xf32> to vector<32x128xf32>
    %48 = arith.addf %44, %47 : vector<32x128xf32>
    %cst_27 = arith.constant dense<0.000000e+00> : vector<1x128xf32>
    %49 = tpu.matmul %21, %48, %cst_27 {dimension_numbers = #tpu.dot_dimension_numbers<[1], [0], [0], [1], [0, 0, 1, 1], [], []>} : vector<1x32xf32>, vector<32x128xf32>, vector<1x128xf32> -> vector<1x128xf32>
    %cst_28 = arith.constant 3.125000e-02 : f32
    %50 = vector.broadcast %cst_28 : f32 to vector<1x128xf32>
    %51 = arith.mulf %49, %50 : vector<1x128xf32>
    %52 = vector.broadcast %51 : vector<1x128xf32> to vector<32x128xf32>
    %53 = arith.subf %48, %52 : vector<32x128xf32>
    %54 = arith.mulf %53, %53 : vector<32x128xf32>
    %cst_29 = arith.constant dense<0.000000e+00> : vector<1x128xf32>
    %55 = tpu.matmul %21, %54, %cst_29 {dimension_numbers = #tpu.dot_dimension_numbers<[1], [0], [0], [1], [0, 0, 1, 1], [], []>} : vector<1x32xf32>, vector<32x128xf32>, vector<1x128xf32> -> vector<1x128xf32>
    %cst_30 = arith.constant 3.125000e-02 : f32
    %56 = vector.broadcast %cst_30 : f32 to vector<1x128xf32>
    %57 = arith.mulf %55, %56 : vector<1x128xf32>
    %cst_31 = arith.constant 9.99999974E-6 : f32
    %58 = vector.broadcast %cst_31 : f32 to vector<1x128xf32>
    %59 = arith.addf %57, %58 : vector<1x128xf32>
    %60 = math.rsqrt %59 : vector<1x128xf32>
    %61 = vector.broadcast %60 : vector<1x128xf32> to vector<32x128xf32>
    %62 = arith.mulf %53, %61 : vector<32x128xf32>
    %c0_32 = arith.constant 0 : index
    %c0_33 = arith.constant 0 : index
    %c0_34 = arith.constant 0 : index
    %63 = vector.load %arg10[%c0_32, %c0_33, %c0_34] : memref<2x1x128xf32, #tpu.memory_space<vmem>>, vector<1x1x128xf32>
    %64 = vector.shape_cast %63 : vector<1x1x128xf32> to vector<1x128xf32>
    %65 = vector.broadcast %64 : vector<1x128xf32> to vector<32x128xf32>
    %66 = arith.mulf %62, %65 : vector<32x128xf32>
    %c0_35 = arith.constant 0 : index
    %c0_36 = arith.constant 0 : index
    %c0_37 = arith.constant 0 : index
    %67 = vector.load %arg11[%c0_35, %c0_36, %c0_37] : memref<2x1x128xf32, #tpu.memory_space<vmem>>, vector<1x1x128xf32>
    %68 = vector.shape_cast %67 : vector<1x1x128xf32> to vector<1x128xf32>
    %69 = vector.broadcast %68 : vector<1x128xf32> to vector<32x128xf32>
    %70 = arith.addf %66, %69 : vector<32x128xf32>
    %cst_38 = arith.constant 0.000000e+00 : f32
    %71 = vector.broadcast %cst_38 : f32 to vector<32x128xf32>
    %72 = arith.maximumf %70, %71 : vector<32x128xf32>
    %c0_39 = arith.constant 0 : index
    %c0_40 = arith.constant 0 : index
    %c0_41 = arith.constant 0 : index
    %73 = vector.load %arg12[%c0_39, %c0_40, %c0_41] : memref<2x128x128xf32, #tpu.memory_space<vmem>>, vector<1x128x128xf32>
    %74 = vector.shape_cast %73 : vector<1x128x128xf32> to vector<128x128xf32>
    %cst_42 = arith.constant dense<0.000000e+00> : vector<32x128xf32>
    %75 = tpu.matmul %72, %74, %cst_42 {dimension_numbers = #tpu.dot_dimension_numbers<[1], [0], [0], [1], [0, 0, 1, 1], [], []>} : vector<32x128xf32>, vector<128x128xf32>, vector<32x128xf32> -> vector<32x128xf32>
    %c0_43 = arith.constant 0 : index
    %c0_44 = arith.constant 0 : index
    %c0_45 = arith.constant 0 : index
    %76 = vector.load %arg13[%c0_43, %c0_44, %c0_45] : memref<2x1x128xf32, #tpu.memory_space<vmem>>, vector<1x1x128xf32>
    %77 = vector.shape_cast %76 : vector<1x1x128xf32> to vector<1x128xf32>
    %78 = vector.broadcast %77 : vector<1x128xf32> to vector<32x128xf32>
    %79 = arith.addf %75, %78 : vector<32x128xf32>
    %cst_46 = arith.constant 0.000000e+00 : f32
    %80 = vector.broadcast %cst_46 : f32 to vector<32x128xf32>
    %81 = arith.maximumf %79, %80 : vector<32x128xf32>
    %c0_47 = arith.constant 0 : index
    %c0_48 = arith.constant 0 : index
    %c0_49 = arith.constant 0 : index
    %82 = vector.load %arg14[%c0_47, %c0_48, %c0_49] : memref<2x1x128xf32, #tpu.memory_space<vmem>>, vector<1x1x128xf32>
    %83 = vector.shape_cast %82 : vector<1x1x128xf32> to vector<1x128xf32>
    %84 = vector.broadcast %83 : vector<1x128xf32> to vector<32x128xf32>
    %85 = arith.mulf %81, %84 : vector<32x128xf32>
    %c0_50 = arith.constant 0 : index
    %c0_51 = arith.constant 0 : index
    %c0_52 = arith.constant 0 : index
    %86 = vector.load %arg15[%c0_50, %c0_51, %c0_52] : memref<2x1x128xf32, #tpu.memory_space<vmem>>, vector<1x1x128xf32>
    %87 = vector.shape_cast %86 : vector<1x1x128xf32> to vector<1x128xf32>
    %88 = vector.broadcast %87 : vector<1x128xf32> to vector<32x128xf32>
    %89 = arith.addf %85, %88 : vector<32x128xf32>
    %cst_53 = arith.constant 0.000000e+00 : f32
    %90 = vector.broadcast %cst_53 : f32 to vector<32x128xf32>
    %91 = arith.maximumf %89, %90 : vector<32x128xf32>
    %92 = arith.addf %91, %22 : vector<32x128xf32>
    %c0_54 = arith.constant 0 : index
    %c0_55 = arith.constant 0 : index
    %93 = vector.load %arg5[%c0_54, %c0_55] : memref<64x6xf32, #tpu.memory_space<vmem>>, vector<64x6xf32>
    %c1 = arith.constant 1 : index
    %c0_56 = arith.constant 0 : index
    %c0_57 = arith.constant 0 : index
    %94 = vector.load %arg6[%c1, %c0_56, %c0_57] : memref<2x6x128xf32, #tpu.memory_space<vmem>>, vector<1x6x128xf32>
    %95 = vector.shape_cast %94 : vector<1x6x128xf32> to vector<6x128xf32>
    %cst_58 = arith.constant dense<0.000000e+00> : vector<64x128xf32>
    %96 = tpu.matmul %93, %95, %cst_58 {dimension_numbers = #tpu.dot_dimension_numbers<[1], [0], [0], [1], [0, 0, 1, 1], [], []>} : vector<64x6xf32>, vector<6x128xf32>, vector<64x128xf32> -> vector<64x128xf32>
    %c1_59 = arith.constant 1 : index
    %c0_60 = arith.constant 0 : index
    %c0_61 = arith.constant 0 : index
    %97 = vector.load %arg7[%c1_59, %c0_60, %c0_61] : memref<2x1x128xf32, #tpu.memory_space<vmem>>, vector<1x1x128xf32>
    %98 = vector.shape_cast %97 : vector<1x1x128xf32> to vector<1x128xf32>
    %99 = vector.broadcast %98 : vector<1x128xf32> to vector<64x128xf32>
    %100 = arith.addf %96, %99 : vector<64x128xf32>
    %101 = arith.truncf %92 : vector<32x128xf32> to vector<32x128xbf16>
    %cst_62 = arith.constant dense<0.000000e+00> : vector<64x128xf32>
    %102 = tpu.matmul %6, %101, %cst_62 {dimension_numbers = #tpu.dot_dimension_numbers<[1], [0], [0], [1], [0, 0, 1, 1], [], []>} : vector<64x32xbf16>, vector<32x128xbf16>, vector<64x128xf32> -> vector<64x128xf32>
    %103 = arith.addf %102, %100 : vector<64x128xf32>
    %cst_63 = arith.constant 0.000000e+00 : f32
    %104 = vector.broadcast %cst_63 : f32 to vector<64x128xf32>
    %105 = arith.maximumf %103, %104 : vector<64x128xf32>
    %106 = arith.truncf %105 : vector<64x128xf32> to vector<64x128xbf16>
    %cst_64 = arith.constant dense<0.000000e+00> : vector<32x128xf32>
    %107 = tpu.matmul %13, %106, %cst_64 {dimension_numbers = #tpu.dot_dimension_numbers<[1], [0], [0], [1], [0, 0, 1, 1], [], []>} : vector<32x64xbf16>, vector<64x128xbf16>, vector<32x128xf32> -> vector<32x128xf32>
    %c1_65 = arith.constant 1 : index
    %108 = memref.load %arg0[%c1_65] : memref<2xf32, #tpu.memory_space<smem>>
    %109 = vector.broadcast %108 : f32 to vector<32x128xf32>
    %110 = arith.mulf %109, %92 : vector<32x128xf32>
    %111 = arith.addf %107, %110 : vector<32x128xf32>
    %c1_66 = arith.constant 1 : index
    %c0_67 = arith.constant 0 : index
    %c0_68 = arith.constant 0 : index
    %112 = vector.load %arg8[%c1_66, %c0_67, %c0_68] : memref<2x128x128xf32, #tpu.memory_space<vmem>>, vector<1x128x128xf32>
    %113 = vector.shape_cast %112 : vector<1x128x128xf32> to vector<128x128xf32>
    %cst_69 = arith.constant dense<0.000000e+00> : vector<32x128xf32>
    %114 = tpu.matmul %111, %113, %cst_69 {dimension_numbers = #tpu.dot_dimension_numbers<[1], [0], [0], [1], [0, 0, 1, 1], [], []>} : vector<32x128xf32>, vector<128x128xf32>, vector<32x128xf32> -> vector<32x128xf32>
    %c1_70 = arith.constant 1 : index
    %c0_71 = arith.constant 0 : index
    %c0_72 = arith.constant 0 : index
    %115 = vector.load %arg9[%c1_70, %c0_71, %c0_72] : memref<2x1x128xf32, #tpu.memory_space<vmem>>, vector<1x1x128xf32>
    %116 = vector.shape_cast %115 : vector<1x1x128xf32> to vector<1x128xf32>
    %117 = vector.broadcast %116 : vector<1x128xf32> to vector<32x128xf32>
    %118 = arith.addf %114, %117 : vector<32x128xf32>
    %cst_73 = arith.constant dense<0.000000e+00> : vector<1x128xf32>
    %119 = tpu.matmul %21, %118, %cst_73 {dimension_numbers = #tpu.dot_dimension_numbers<[1], [0], [0], [1], [0, 0, 1, 1], [], []>} : vector<1x32xf32>, vector<32x128xf32>, vector<1x128xf32> -> vector<1x128xf32>
    %cst_74 = arith.constant 3.125000e-02 : f32
    %120 = vector.broadcast %cst_74 : f32 to vector<1x128xf32>
    %121 = arith.mulf %119, %120 : vector<1x128xf32>
    %122 = vector.broadcast %121 : vector<1x128xf32> to vector<32x128xf32>
    %123 = arith.subf %118, %122 : vector<32x128xf32>
    %124 = arith.mulf %123, %123 : vector<32x128xf32>
    %cst_75 = arith.constant dense<0.000000e+00> : vector<1x128xf32>
    %125 = tpu.matmul %21, %124, %cst_75 {dimension_numbers = #tpu.dot_dimension_numbers<[1], [0], [0], [1], [0, 0, 1, 1], [], []>} : vector<1x32xf32>, vector<32x128xf32>, vector<1x128xf32> -> vector<1x128xf32>
    %cst_76 = arith.constant 3.125000e-02 : f32
    %126 = vector.broadcast %cst_76 : f32 to vector<1x128xf32>
    %127 = arith.mulf %125, %126 : vector<1x128xf32>
    %cst_77 = arith.constant 9.99999974E-6 : f32
    %128 = vector.broadcast %cst_77 : f32 to vector<1x128xf32>
    %129 = arith.addf %127, %128 : vector<1x128xf32>
    %130 = math.rsqrt %129 : vector<1x128xf32>
    %131 = vector.broadcast %130 : vector<1x128xf32> to vector<32x128xf32>
    %132 = arith.mulf %123, %131 : vector<32x128xf32>
    %c1_78 = arith.constant 1 : index
    %c0_79 = arith.constant 0 : index
    %c0_80 = arith.constant 0 : index
    %133 = vector.load %arg10[%c1_78, %c0_79, %c0_80] : memref<2x1x128xf32, #tpu.memory_space<vmem>>, vector<1x1x128xf32>
    %134 = vector.shape_cast %133 : vector<1x1x128xf32> to vector<1x128xf32>
    %135 = vector.broadcast %134 : vector<1x128xf32> to vector<32x128xf32>
    %136 = arith.mulf %132, %135 : vector<32x128xf32>
    %c1_81 = arith.constant 1 : index
    %c0_82 = arith.constant 0 : index
    %c0_83 = arith.constant 0 : index
    %137 = vector.load %arg11[%c1_81, %c0_82, %c0_83] : memref<2x1x128xf32, #tpu.memory_space<vmem>>, vector<1x1x128xf32>
    %138 = vector.shape_cast %137 : vector<1x1x128xf32> to vector<1x128xf32>
    %139 = vector.broadcast %138 : vector<1x128xf32> to vector<32x128xf32>
    %140 = arith.addf %136, %139 : vector<32x128xf32>
    %cst_84 = arith.constant 0.000000e+00 : f32
    %141 = vector.broadcast %cst_84 : f32 to vector<32x128xf32>
    %142 = arith.maximumf %140, %141 : vector<32x128xf32>
    %c1_85 = arith.constant 1 : index
    %c0_86 = arith.constant 0 : index
    %c0_87 = arith.constant 0 : index
    %143 = vector.load %arg12[%c1_85, %c0_86, %c0_87] : memref<2x128x128xf32, #tpu.memory_space<vmem>>, vector<1x128x128xf32>
    %144 = vector.shape_cast %143 : vector<1x128x128xf32> to vector<128x128xf32>
    %cst_88 = arith.constant dense<0.000000e+00> : vector<32x128xf32>
    %145 = tpu.matmul %142, %144, %cst_88 {dimension_numbers = #tpu.dot_dimension_numbers<[1], [0], [0], [1], [0, 0, 1, 1], [], []>} : vector<32x128xf32>, vector<128x128xf32>, vector<32x128xf32> -> vector<32x128xf32>
    %c1_89 = arith.constant 1 : index
    %c0_90 = arith.constant 0 : index
    %c0_91 = arith.constant 0 : index
    %146 = vector.load %arg13[%c1_89, %c0_90, %c0_91] : memref<2x1x128xf32, #tpu.memory_space<vmem>>, vector<1x1x128xf32>
    %147 = vector.shape_cast %146 : vector<1x1x128xf32> to vector<1x128xf32>
    %148 = vector.broadcast %147 : vector<1x128xf32> to vector<32x128xf32>
    %149 = arith.addf %145, %148 : vector<32x128xf32>
    %cst_92 = arith.constant 0.000000e+00 : f32
    %150 = vector.broadcast %cst_92 : f32 to vector<32x128xf32>
    %151 = arith.maximumf %149, %150 : vector<32x128xf32>
    %c1_93 = arith.constant 1 : index
    %c0_94 = arith.constant 0 : index
    %c0_95 = arith.constant 0 : index
    %152 = vector.load %arg14[%c1_93, %c0_94, %c0_95] : memref<2x1x128xf32, #tpu.memory_space<vmem>>, vector<1x1x128xf32>
    %153 = vector.shape_cast %152 : vector<1x1x128xf32> to vector<1x128xf32>
    %154 = vector.broadcast %153 : vector<1x128xf32> to vector<32x128xf32>
    %155 = arith.mulf %151, %154 : vector<32x128xf32>
    %c1_96 = arith.constant 1 : index
    %c0_97 = arith.constant 0 : index
    %c0_98 = arith.constant 0 : index
    %156 = vector.load %arg15[%c1_96, %c0_97, %c0_98] : memref<2x1x128xf32, #tpu.memory_space<vmem>>, vector<1x1x128xf32>
    %157 = vector.shape_cast %156 : vector<1x1x128xf32> to vector<1x128xf32>
    %158 = vector.broadcast %157 : vector<1x128xf32> to vector<32x128xf32>
    %159 = arith.addf %155, %158 : vector<32x128xf32>
    %160 = arith.addf %159, %92 : vector<32x128xf32>
    %161 = arith.truncf %160 : vector<32x128xf32> to vector<32x128xbf16>
    %cst_99 = arith.constant dense<0.000000e+00> : vector<2x128xf32>
    %162 = tpu.matmul %20, %161, %cst_99 {dimension_numbers = #tpu.dot_dimension_numbers<[1], [0], [0], [1], [0, 0, 1, 1], [], []>} : vector<2x32xbf16>, vector<32x128xbf16>, vector<2x128xf32> -> vector<2x128xf32>
    %c0_100 = arith.constant 0 : index
    %c0_101 = arith.constant 0 : index
    %163 = vector.load %arg16[%c0_100, %c0_101] : memref<128x128xf32, #tpu.memory_space<vmem>>, vector<128x128xf32>
    %cst_102 = arith.constant dense<0.000000e+00> : vector<2x128xf32>
    %164 = tpu.matmul %162, %163, %cst_102 {dimension_numbers = #tpu.dot_dimension_numbers<[1], [0], [0], [1], [0, 0, 1, 1], [], []>} : vector<2x128xf32>, vector<128x128xf32>, vector<2x128xf32> -> vector<2x128xf32>
    %c0_103 = arith.constant 0 : index
    %c0_104 = arith.constant 0 : index
    %165 = vector.load %arg17[%c0_103, %c0_104] : memref<1x128xf32, #tpu.memory_space<vmem>>, vector<1x128xf32>
    %166 = vector.broadcast %165 : vector<1x128xf32> to vector<2x128xf32>
    %167 = arith.addf %164, %166 : vector<2x128xf32>
    %cst_105 = arith.constant 0.000000e+00 : f32
    %cst_106 = arith.constant 5.000000e+01 : f32
    %168 = vector.broadcast %cst_105 : f32 to vector<2x128xf32>
    %169 = arith.maximumf %168, %167 : vector<2x128xf32>
    %170 = vector.broadcast %cst_106 : f32 to vector<2x128xf32>
    %171 = arith.minimumf %170, %169 : vector<2x128xf32>
    %c0_107 = arith.constant 0 : index
    %c0_108 = arith.constant 0 : index
    %172 = vector.load %arg18[%c0_107, %c0_108] : memref<2x128xf32, #tpu.memory_space<vmem>>, vector<2x128xf32>
    tpu.vector_store %arg18[%c0_107, %c0_108], %171 {strides = array<i32>} : memref<2x128xf32, #tpu.memory_space<vmem>>, vector<2x128xf32>,
    return
  }
}

</mosaic_0001>

<llo_original>
// kernel: tpu_custom_call.1
$region0: #{tpu_custom_call.1}
  #allocation0 [shape = 'u32[]', space=smem, size = 0x4, offset = 0x4, fixed_abs, tag = 'smem constant byte address 0x4 - core index']
  #allocation1 [shape = 'u32[144,128]{1,0:T(1,128)}', space=vmem, size = 0x12000, scoped, tag = 'internal scratch']
  %s0 = inlined_call_operand.vmem [shape: f32[2], index: 0, kind: input, shape index: {}]
  %s1 = inlined_call_operand.vmem [shape: f32[32,128], index: 1, kind: input, shape index: {}]
  %s2 = inlined_call_operand.vmem [shape: s32[64,1], index: 2, kind: input, shape index: {}]
  %s3 = inlined_call_operand.vmem [shape: s32[1,64], index: 3, kind: input, shape index: {}]
  %s4 = inlined_call_operand.vmem [shape: s32[1,32], index: 4, kind: input, shape index: {}]
  %s5 = inlined_call_operand.vmem [shape: f32[64,6], index: 5, kind: input, shape index: {}]
  %s6 = inlined_call_operand.vmem [shape: f32[2,6,128], index: 6, kind: input, shape index: {}]
  %s7 = inlined_call_operand.vmem [shape: f32[2,1,128], index: 7, kind: input, shape index: {}]
  %s8 = inlined_call_operand.hbm [shape: f32[2,128,128], index: 8, kind: input, shape index: {}]
  %s9 = inlined_call_operand.vmem [shape: f32[2,1,128], index: 9, kind: input, shape index: {}]
  %s10 = inlined_call_operand.vmem [shape: f32[2,1,128], index: 10, kind: input, shape index: {}]
  %s11 = inlined_call_operand.vmem [shape: f32[2,1,128], index: 11, kind: input, shape index: {}]
  %s12 = inlined_call_operand.hbm [shape: f32[2,128,128], index: 12, kind: input, shape index: {}]
  %s13 = inlined_call_operand.vmem [shape: f32[2,1,128], index: 13, kind: input, shape index: {}]
  %s14 = inlined_call_operand.vmem [shape: f32[2,1,128], index: 14, kind: input, shape index: {}]
  %s15 = inlined_call_operand.vmem [shape: f32[2,1,128], index: 15, kind: input, shape index: {}]
  %s16 = inlined_call_operand.vmem [shape: f32[128,128], index: 16, kind: input, shape index: {}]
  %s17 = inlined_call_operand.vmem [shape: f32[1,128], index: 17, kind: input, shape index: {}]
  %s18 = inlined_call_operand.hbm [shape: f32[2,128], index: 18, kind: output, shape index: {}]
  %s19 = sld [smem:[#allocation0]]
  $region94: #{tpu_custom_call.1} parent=0
    _
  %s21 = ssub.s32 1, %s19
  %s22 = scalar_select 0, %s21, %s19
  $region1: #{tpu_custom_call.1} parent=0
    #allocation2 [shape = 'u8[512]{0}', space=smem, size = 0x200, scoped, tag = 'input window, operand 0, single buffered']
    #allocation3 [shape = 's32[1]{0}', space=sflag, size = 0x4, scoped, tag = 'scoped memory for tpu_custom_call.1']
    #allocation4 [shape = 's32[1]{0}', space=sflag, size = 0x4, scoped, tag = 'scoped memory for tpu_custom_call.1']
    #allocation5 [shape = 's32[1]{0}', space=sflag, size = 0x4, scoped, tag = 'scoped memory for tpu_custom_call.1']
    #allocation6 [shape = 'u8[131072]{0}', space=vmem, size = 0x20000, scoped, tag = 'input window, operand 8, single buffered']
    #allocation7 [shape = 'u8[131072]{0}', space=vmem, size = 0x20000, scoped, tag = 'input window, operand 12, single buffered']
    #allocation8 [shape = 's32[1]{0}', space=sflag, size = 0x4, scoped, tag = 'scoped memory for tpu_custom_call.1']
    #allocation9 [shape = 'u8[1024]{0}', space=vmem, size = 0x400, scoped, tag = 'output window, operand 0, single buffered']
    %23 = vsyncpa [#allocation5], 0
    %24 = vsyncpa [#allocation3], 0
    %25 = vsyncpa [#allocation8], 0
    %26 = vsyncpa [#allocation4], 0
    // Predicated region
    $region2: #{tpu_custom_call.1} parent=1 // pred_check
      _
    $region3: #{tpu_custom_call.1} parent=1 // pred_check_branch
      %28 = sbr.rel (0) target = $region5
    $region4: #{tpu_custom_call.1} parent=1 // pred_region
      %s30 = ssub.s32 16, 16
      %31 = vsyncadd [#allocation5], %s30
      %s33 = sshll.u32 %s0, 4
      %s34 = int_to_ptr.vmem [resolvable:$true] %s33
      %36 = dma.vmem_to_smem %s34, 16, [#allocation2], [#allocation5]
    $region5: #{tpu_custom_call.1} parent=1 // pred_fallthru
      _
    // Predicated region
    $region6: #{tpu_custom_call.1} parent=1 // pred_check
      _
    $region7: #{tpu_custom_call.1} parent=1 // pred_check_branch
      %38 = sbr.rel (0) target = $region9
    $region8: #{tpu_custom_call.1} parent=1 // pred_region
      _
    $region9: #{tpu_custom_call.1} parent=1 // pred_fallthru
      _
    // Predicated region
    $region10: #{tpu_custom_call.1} parent=1 // pred_check
      _
    $region11: #{tpu_custom_call.1} parent=1 // pred_check_branch
      %40 = sbr.rel (0) target = $region13
    $region12: #{tpu_custom_call.1} parent=1 // pred_region
      _
    $region13: #{tpu_custom_call.1} parent=1 // pred_fallthru
      _
    // Predicated region
    $region14: #{tpu_custom_call.1} parent=1 // pred_check
      _
    $region15: #{tpu_custom_call.1} parent=1 // pred_check_branch
      %42 = sbr.rel (0) target = $region17
    $region16: #{tpu_custom_call.1} parent=1 // pred_region
      _
    $region17: #{tpu_custom_call.1} parent=1 // pred_fallthru
      _
    // Predicated region
    $region18: #{tpu_custom_call.1} parent=1 // pred_check
      _
    $region19: #{tpu_custom_call.1} parent=1 // pred_check_branch
      %44 = sbr.rel (0) target = $region21
    $region20: #{tpu_custom_call.1} parent=1 // pred_region
      _
    $region21: #{tpu_custom_call.1} parent=1 // pred_fallthru
      _
    // Predicated region
    $region22: #{tpu_custom_call.1} parent=1 // pred_check
      _
    $region23: #{tpu_custom_call.1} parent=1 // pred_check_branch
      %46 = sbr.rel (0) target = $region25
    $region24: #{tpu_custom_call.1} parent=1 // pred_region
      _
    $region25: #{tpu_custom_call.1} parent=1 // pred_fallthru
      _
    // Predicated region
    $region26: #{tpu_custom_call.1} parent=1 // pred_check
      _
    $region27: #{tpu_custom_call.1} parent=1 // pred_check_branch
      %48 = sbr.rel (0) target = $region29
    $region28: #{tpu_custom_call.1} parent=1 // pred_region
      _
    $region29: #{tpu_custom_call.1} parent=1 // pred_fallthru
      _
    // Predicated region
    $region30: #{tpu_custom_call.1} parent=1 // pred_check
      _
    $region31: #{tpu_custom_call.1} parent=1 // pred_check_branch
      %50 = sbr.rel (0) target = $region33
    $region32: #{tpu_custom_call.1} parent=1 // pred_region
      _
    $region33: #{tpu_custom_call.1} parent=1 // pred_fallthru
      _
    // Predicated region
    $region34: #{tpu_custom_call.1} parent=1 // pred_check
      _
    $region35: #{tpu_custom_call.1} parent=1 // pred_check_branch
      %52 = sbr.rel (0) target = $region37
    $region36: #{tpu_custom_call.1} parent=1 // pred_region
      %s54 = ssub.s32 4096, 4096
      %55 = vsyncadd [#allocation3], %s54
      %s56 = sshll.u32 [#allocation6], 4
      %s57 = int_to_ptr.vmem [resolvable:$true] %s56
      %62 = dma.hbm_to_vmem [thread:$0]  %s8, 4096, %s57, [#allocation3], 128, 128, 8
    $region37: #{tpu_custom_call.1} parent=1 // pred_fallthru
      _
    // Predicated region
    $region38: #{tpu_custom_call.1} parent=1 // pred_check
      _
    $region39: #{tpu_custom_call.1} parent=1 // pred_check_branch
      %64 = sbr.rel (0) target = $region41
    $region40: #{tpu_custom_call.1} parent=1 // pred_region
      _
    $region41: #{tpu_custom_call.1} parent=1 // pred_fallthru
      _
    // Predicated region
    $region42: #{tpu_custom_call.1} parent=1 // pred_check
      _
    $region43: #{tpu_custom_call.1} parent=1 // pred_check_branch
      %66 = sbr.rel (0) target = $region45
    $region44: #{tpu_custom_call.1} parent=1 // pred_region
      _
    $region45: #{tpu_custom_call.1} parent=1 // pred_fallthru
      _
    // Predicated region
    $region46: #{tpu_custom_call.1} parent=1 // pred_check
      _
    $region47: #{tpu_custom_call.1} parent=1 // pred_check_branch
      %68 = sbr.rel (0) target = $region49
    $region48: #{tpu_custom_call.1} parent=1 // pred_region
      _
    $region49: #{tpu_custom_call.1} parent=1 // pred_fallthru
      _
    // Predicated region
    $region50: #{tpu_custom_call.1} parent=1 // pred_check
      _
    $region51: #{tpu_custom_call.1} parent=1 // pred_check_branch
      %70 = sbr.rel (0) target = $region53
    $region52: #{tpu_custom_call.1} parent=1 // pred_region
      %s72 = ssub.s32 4096, 4096
      %73 = vsyncadd [#allocation8], %s72
      %s74 = sshll.u32 [#allocation7], 4
      %s75 = int_to_ptr.vmem [resolvable:$true] %s74
      %80 = dma.hbm_to_vmem [thread:$0]  %s12, 4096, %s75, [#allocation8], 128, 128, 8
    $region53: #{tpu_custom_call.1} parent=1 // pred_fallthru
      _
    // Predicated region
    $region54: #{tpu_custom_call.1} parent=1 // pred_check
      _
    $region55: #{tpu_custom_call.1} parent=1 // pred_check_branch
      %82 = sbr.rel (0) target = $region57
    $region56: #{tpu_custom_call.1} parent=1 // pred_region
      _
    $region57: #{tpu_custom_call.1} parent=1 // pred_fallthru
      _
    // Predicated region
    $region58: #{tpu_custom_call.1} parent=1 // pred_check
      _
    $region59: #{tpu_custom_call.1} parent=1 // pred_check_branch
      %84 = sbr.rel (0) target = $region61
    $region60: #{tpu_custom_call.1} parent=1 // pred_region
      _
    $region61: #{tpu_custom_call.1} parent=1 // pred_fallthru
      _
    // Predicated region
    $region62: #{tpu_custom_call.1} parent=1 // pred_check
      _
    $region63: #{tpu_custom_call.1} parent=1 // pred_check_branch
      %86 = sbr.rel (0) target = $region65
    $region64: #{tpu_custom_call.1} parent=1 // pred_region
      _
    $region65: #{tpu_custom_call.1} parent=1 // pred_fallthru
      _
    // Predicated region
    $region66: #{tpu_custom_call.1} parent=1 // pred_check
      _
    $region67: #{tpu_custom_call.1} parent=1 // pred_check_branch
      %88 = sbr.rel (0) target = $region69
    $region68: #{tpu_custom_call.1} parent=1 // pred_region
      _
    $region69: #{tpu_custom_call.1} parent=1 // pred_fallthru
      _
    // Predicated region
    $region70: #{tpu_custom_call.1} parent=1 // pred_check
      _
    $region71: #{tpu_custom_call.1} parent=1 // pred_check_branch
      %90 = sbr.rel (0) target = $region73
    $region72: #{tpu_custom_call.1} parent=1 // pred_region
      _
    $region73: #{tpu_custom_call.1} parent=1 // pred_fallthru
      _
    // Predicated region
    $region74: #{tpu_custom_call.1} parent=1 // pred_check
      _
    $region75: #{tpu_custom_call.1} parent=1 // pred_check_branch
      %92 = sbr.rel (0) target = $region77
    $region76: #{tpu_custom_call.1} parent=1 // pred_region
      %93 = dma.done [#allocation5], 16
    $region77: #{tpu_custom_call.1} parent=1 // pred_fallthru
      _
    // Predicated region
    $region78: #{tpu_custom_call.1} parent=1 // pred_check
      _
    $region79: #{tpu_custom_call.1} parent=1 // pred_check_branch
      %95 = sbr.rel (0) target = $region81
    $region80: #{tpu_custom_call.1} parent=1 // pred_region
      %96 = dma.done [#allocation3], 4096
    $region81: #{tpu_custom_call.1} parent=1 // pred_fallthru
      _
    // Predicated region
    $region82: #{tpu_custom_call.1} parent=1 // pred_check
      _
    $region83: #{tpu_custom_call.1} parent=1 // pred_check_branch
      %98 = sbr.rel (0) target = $region85
    $region84: #{tpu_custom_call.1} parent=1 // pred_region
      %99 = dma.done [#allocation8], 4096
    $region85: #{tpu_custom_call.1} parent=1 // pred_fallthru
      _
    %100 = sfence
    %v102 = vld [vmem:[%s2] sm:$0xff]
    %v103 = vld [vmem:[%s2 + $0x8] sm:$0xff]
    %v104 = vld [vmem:[%s2 + $0x10] sm:$0xff]
    %v105 = vld [vmem:[%s2 + $0x18] sm:$0xff]
    %v106 = vld [vmem:[%s2 + $0x20] sm:$0xff]
    %v107 = vld [vmem:[%s2 + $0x28] sm:$0xff]
    %v108 = vld [vmem:[%s2 + $0x30] sm:$0xff]
    %v109 = vld [vmem:[%s2 + $0x38] sm:$0xff]
    %v110 = vlaneseq
    %v111 = vand.u32 %v110, 127
    %112 = vset.pattern.permute.xlu0 0
    %113 = vperm.xlu0 %112, %v102
    %v114 = vpop.permute.xlu0 %113
    %115 = vset.pattern.permute.xlu0 0
    %116 = vperm.xlu0 %115, %v103
    %v117 = vpop.permute.xlu0 %116
    %118 = vset.pattern.permute.xlu0 0
    %119 = vperm.xlu0 %118, %v104
    %v120 = vpop.permute.xlu0 %119
    %121 = vset.pattern.permute.xlu0 0
    %122 = vperm.xlu0 %121, %v105
    %v123 = vpop.permute.xlu0 %122
    %124 = vset.pattern.permute.xlu0 0
    %125 = vperm.xlu0 %124, %v106
    %v126 = vpop.permute.xlu0 %125
    %127 = vset.pattern.permute.xlu0 0
    %128 = vperm.xlu0 %127, %v107
    %v129 = vpop.permute.xlu0 %128
    %130 = vset.pattern.permute.xlu0 0
    %131 = vperm.xlu0 %130, %v108
    %v132 = vpop.permute.xlu0 %131
    %133 = vset.pattern.permute.xlu0 0
    %134 = vperm.xlu0 %133, %v109
    %v135 = vpop.permute.xlu0 %134
    %vm136 = vcmp.eq.s32.totalorder %v114, %v111
    %vm137 = vcmp.eq.s32.totalorder %v117, %v111
    %vm138 = vcmp.eq.s32.totalorder %v120, %v111
    %vm139 = vcmp.eq.s32.totalorder %v123, %v111
    %vm140 = vcmp.eq.s32.totalorder %v126, %v111
    %vm141 = vcmp.eq.s32.totalorder %v129, %v111
    %vm142 = vcmp.eq.s32.totalorder %v132, %v111
    %vm143 = vcmp.eq.s32.totalorder %v135, %v111
    %v144 = vsel %vm136, 1, 0
    %v145 = vsel %vm137, 1, 0
    %v146 = vsel %vm138, 1, 0
    %v147 = vsel %vm139, 1, 0
    %v148 = vsel %vm140, 1, 0
    %v149 = vsel %vm141, 1, 0
    %v150 = vsel %vm142, 1, 0
    %v151 = vsel %vm143, 1, 0
    %v152 = vcvt.s32.f32 %v144
    %v153 = vcvt.s32.f32 %v145
    %v154 = vcvt.s32.f32 %v146
    %v155 = vcvt.s32.f32 %v147
    %v156 = vcvt.s32.f32 %v148
    %v157 = vcvt.s32.f32 %v149
    %v158 = vcvt.s32.f32 %v150
    %v159 = vcvt.s32.f32 %v151
    %v160 = vpack.c.bf16 %v153, %v152
    %v161 = vpack.c.bf16 %v155, %v154
    %v162 = vpack.c.bf16 %v157, %v156
    %v163 = vpack.c.bf16 %v159, %v158
    %v164 = vld [vmem:[%s3] sm:$0x1]
    %v165 = vlaneseq
    %v166 = vshrl.u32 %v165, 7
    %v167 = vadd.s32 %v166, 8
    %v168 = vadd.s32 %v166, 16
    %v169 = vadd.s32 %v166, 24
    %v170 = vlaneseq
    %v171 = vshrl.u32 %v170, 7
    %v172 = vsub.s32 0, %v171
    %v173 = vrot.slane %v164, %v172
    %vm174 = vcmp.eq.s32.totalorder %v173, %v166
    %vm175 = vcmp.eq.s32.totalorder %v173, %v167
    %vm176 = vcmp.eq.s32.totalorder %v173, %v168
    %vm177 = vcmp.eq.s32.totalorder %v173, %v169
    %v178 = vsel %vm174, 1, 0
    %v179 = vsel %vm175, 1, 0
    %v180 = vsel %vm176, 1, 0
    %v181 = vsel %vm177, 1, 0
    %v182 = vcvt.s32.f32 %v178
    %v183 = vcvt.s32.f32 %v179
    %v184 = vcvt.s32.f32 %v180
    %v185 = vcvt.s32.f32 %v181
    %v186 = vpack.c.bf16 %v183, %v182
    %v187 = vpack.c.bf16 %v185, %v184
    %v188 = vld [vmem:[%s4] sm:$0x1]
    %v189 = vlaneseq
    %v190 = vshrl.u32 %v189, 7
    %v191 = vsub.s32 0, %v190
    %v192 = vrot.slane %v188, %v191
    %vm193 = vcmp.eq.s32.totalorder %v192, %v166
    %v194 = vsel %vm193, 1, 0
    %v195 = vcvt.s32.f32 %v194
    %v196 = vpack.c.bf16 %v195, %v195
    %v197 = vld [vmem:[%s1] sm:$0xff]
    %v198 = vld [vmem:[%s1 + $0x8] sm:$0xff]
    %v199 = vld [vmem:[%s1 + $0x10] sm:$0xff]
    %v200 = vld [vmem:[%s1 + $0x18] sm:$0xff]
    %v201 = vld [vmem:[%s5] sm:$0xff]
    %v202 = vld [vmem:[%s5 + $0x8] sm:$0xff]
    %v203 = vld [vmem:[%s5 + $0x10] sm:$0xff]
    %v204 = vld [vmem:[%s5 + $0x18] sm:$0xff]
    %v205 = vld [vmem:[%s5 + $0x20] sm:$0xff]
    %v206 = vld [vmem:[%s5 + $0x28] sm:$0xff]
    %v207 = vld [vmem:[%s5 + $0x30] sm:$0xff]
    %v208 = vld [vmem:[%s5 + $0x38] sm:$0xff]
    %v209 = vld [vmem:[%s6] sm:$0x3f]
    %v210 = vld [vmem:[%s7] sm:$0x1]
    %v212 = vlaneseq
    %v213 = vshrl.u32 %v212, 7
    %v214 = vsub.s32 0, %v213
    %v215 = vrot.slane %v210, %v214
    %vm217 = vcmask 48128
    %v219 = vsel %vm217, %v201, 0
    %v222 = vsel %vm217, %v202, 0
    %v225 = vsel %vm217, %v203, 0
    %v228 = vsel %vm217, %v204, 0
    %v231 = vsel %vm217, %v205, 0
    %v234 = vsel %vm217, %v206, 0
    %v237 = vsel %vm217, %v207, 0
    %v240 = vsel %vm217, %v208, 0
    %vm242 = vcmask 1045504
    %v244 = vsel %vm242, %v209, 0
    %246 = vmatprep.subr.mxu0 0.0
    %247 = vmatpush1.msra.mxu0 %v244
    %248 = vmatprep.subr.mxu0 0.0
    %249 = vmatpush1.msra.mxu0 0.0
    %250 = vmatprep.subr.mxu0 0.0
    %251 = vmatpush1.msra.mxu0 0.0
    %252 = vmatprep.subr.mxu0 0.0
    %253 = vmatpush1.msra.mxu0 0.0
    %254 = vmatprep.subr.mxu0 0.0
    %255 = vmatpush1.msra.mxu0 0.0
    %256 = vmatprep.subr.mxu0 0.0
    %257 = vmatpush1.msra.mxu0 0.0
    %258 = vmatprep.subr.mxu0 0.0
    %259 = vmatpush1.msra.mxu0 0.0
    %260 = vmatprep.subr.mxu0 0.0
    %261 = vmatpush1.msra.mxu0 0.0
    %262 = vmatprep.subr.mxu0 0.0
    %263 = vmatpush1.msra.mxu0 0.0
    %264 = vmatprep.subr.mxu0 0.0
    %265 = vmatpush1.msra.mxu0 0.0
    %266 = vmatprep.subr.mxu0 0.0
    %267 = vmatpush1.msra.mxu0 0.0
    %268 = vmatprep.subr.mxu0 0.0
    %269 = vmatpush1.msra.mxu0 0.0
    %270 = vmatprep.subr.mxu0 0.0
    %271 = vmatpush1.msra.mxu0 0.0
    %272 = vmatprep.subr.mxu0 0.0
    %273 = vmatpush1.msra.mxu0 0.0
    %274 = vmatprep.subr.mxu0 0.0
    %275 = vmatpush1.msra.mxu0 0.0
    %276 = vmatprep.subr.mxu0 0.0
    %277 = vmatpush1.msra.mxu0 0.0
    %278 = vmatprep.subr.mxu0 0.0
    %279 = vmatpush1.msra.mxu0 0.0
    %280 = vmatprep.subr.mxu0 0.0
    %281 = vmatpush1.msra.mxu0 0.0
    %282 = vmatprep.subr.mxu0 0.0
    %283 = vmatpush1.msra.mxu0 0.0
    %284 = vmatprep.subr.mxu0 0.0
    %285 = vmatpush1.msra.mxu0 0.0
    %286 = vmatprep.subr.mxu0 0.0
    %287 = vmatpush1.msra.mxu0 0.0
    %288 = vmatprep.subr.mxu0 0.0
    %289 = vmatpush1.msra.mxu0 0.0
    %290 = vmatprep.subr.mxu0 0.0
    %291 = vmatpush1.msra.mxu0 0.0
    %292 = vmatprep.subr.mxu0 0.0
    %293 = vmatpush1.msra.mxu0 0.0
    %294 = vmatprep.subr.mxu0 0.0
    %295 = vmatpush1.msra.mxu0 0.0
    %296 = vmatprep.subr.mxu0 0.0
    %297 = vmatpush1.msra.mxu0 0.0
    %298 = vmatprep.subr.mxu0 0.0
    %299 = vmatpush1.msra.mxu0 0.0
    %300 = vmatprep.subr.mxu0 0.0
    %301 = vmatpush1.msra.mxu0 0.0
    %302 = vmatprep.subr.mxu0 0.0
    %303 = vmatpush1.msra.mxu0 0.0
    %304 = vmatprep.subr.mxu0 0.0
    %305 = vmatpush1.msra.mxu0 0.0
    %306 = vmatprep.subr.mxu0 0.0
    %307 = vmatpush1.msra.mxu0 0.0
    %308 = vmatprep.subr.mxu0 0.0
    %309 = vmatpush1.msra.mxu0 0.0
    %310 = vmatprep.mubr.f32.mxu0 0.0
    %311 = vmatmul.mubr.f32.gmra.mrb[0].mxu0 %v219
    %v312 = vpop.f32.mrb[0].mxu0
    %v313 = vadd.f32 %v215, %v312
    %v314 = vpop.f32.mrb[0].mxu0
    %315 = vmatprep.mubr.f32.mxu0 0.0
    %316 = vmatmul.mubr.f32.gmra.mrb[0].mxu0 %v222
    %v317 = vpop.f32.mrb[0].mxu0
    %v318 = vadd.f32 %v215, %v317
    %v319 = vpop.f32.mrb[0].mxu0
    %320 = vmatprep.mubr.f32.mxu0 0.0
    %321 = vmatmul.mubr.f32.gmra.mrb[0].mxu0 %v225
    %v322 = vpop.f32.mrb[0].mxu0
    %v323 = vadd.f32 %v215, %v322
    %v324 = vpop.f32.mrb[0].mxu0
    %325 = vmatprep.mubr.f32.mxu0 0.0
    %326 = vmatmul.mubr.f32.gmra.mrb[0].mxu0 %v228
    %v327 = vpop.f32.mrb[0].mxu0
    %v328 = vadd.f32 %v215, %v327
    %v329 = vpop.f32.mrb[0].mxu0
    %330 = vmatprep.mubr.f32.mxu0 0.0
    %331 = vmatmul.mubr.f32.gmra.mrb[0].mxu0 %v231
    %v332 = vpop.f32.mrb[0].mxu0
    %v333 = vadd.f32 %v215, %v332
    %v334 = vpop.f32.mrb[0].mxu0
    %335 = vmatprep.mubr.f32.mxu0 0.0
    %336 = vmatmul.mubr.f32.gmra.mrb[0].mxu0 %v234
    %v337 = vpop.f32.mrb[0].mxu0
    %v338 = vadd.f32 %v215, %v337
    %v339 = vpop.f32.mrb[0].mxu0
    %340 = vmatprep.mubr.f32.mxu0 0.0
    %341 = vmatmul.mubr.f32.gmra.mrb[0].mxu0 %v237
    %v342 = vpop.f32.mrb[0].mxu0
    %v343 = vadd.f32 %v215, %v342
    %v344 = vpop.f32.mrb[0].mxu0
    %345 = vmatprep.mubr.f32.mxu0 0.0
    %346 = vmatmul.mubr.f32.gmra.mrb[0].mxu0 %v240
    %v347 = vpop.f32.mrb[0].mxu0
    %v348 = vadd.f32 %v215, %v347
    %v349 = vpop.f32.mrb[0].mxu0
    %350 = vdwg.mxu0
    %v351 = vpack.c.bf16 %v198, %v197
    %v352 = vpack.c.bf16 %v200, %v199
    %vm353 = vcmask 261120
    %v355 = vsel %vm353, %v160, 0
    %v358 = vsel %vm353, %v161, 0
    %v361 = vsel %vm353, %v162, 0
    %v364 = vsel %vm353, %v163, 0
    %366 = vmatprep.subr.bf16.mxu0 0
    %367 = vmatpush1.bf16.msra.mxu0 %v351
    %368 = vmatprep.subr.bf16.mxu0 0
    %369 = vmatpush1.bf16.msra.mxu0 %v352
    %370 = vmatprep.subr.bf16.mxu0 0
    %371 = vmatpush1.bf16.msra.mxu0 0
    %372 = vmatprep.subr.bf16.mxu0 0
    %373 = vmatpush1.bf16.msra.mxu0 0
    %374 = vmatprep.subr.bf16.mxu0 0
    %375 = vmatpush1.bf16.msra.mxu0 0
    %376 = vmatprep.subr.bf16.mxu0 0
    %377 = vmatpush1.bf16.msra.mxu0 0
    %378 = vmatprep.subr.bf16.mxu0 0
    %379 = vmatpush1.bf16.msra.mxu0 0
    %380 = vmatprep.subr.bf16.mxu0 0
    %381 = vmatpush1.bf16.msra.mxu0 0
    %382 = vmatprep.subr.bf16.mxu0 0
    %383 = vmatpush1.bf16.msra.mxu0 0
    %384 = vmatprep.subr.bf16.mxu0 0
    %385 = vmatpush1.bf16.msra.mxu0 0
    %386 = vmatprep.subr.bf16.mxu0 0
    %387 = vmatpush1.bf16.msra.mxu0 0
    %388 = vmatprep.subr.bf16.mxu0 0
    %389 = vmatpush1.bf16.msra.mxu0 0
    %390 = vmatprep.subr.bf16.mxu0 0
    %391 = vmatpush1.bf16.msra.mxu0 0
    %392 = vmatprep.subr.bf16.mxu0 0
    %393 = vmatpush1.bf16.msra.mxu0 0
    %394 = vmatprep.subr.bf16.mxu0 0
    %395 = vmatpush1.bf16.msra.mxu0 0
    %396 = vmatprep.subr.bf16.mxu0 0
    %397 = vmatpush1.bf16.msra.mxu0 0
    %398 = vmatprep.mubr.bf16.mxu0 0
    %399 = vmatmul.mubr.bf16.gmra.mrb[0].mxu0 %v355
    %v400 = vpop.f32.mrb[0].mxu0
    %v401 = vadd.f32 %v313, %v400
    %v402 = vpop.f32.mrb[0].mxu0
    %v403 = vpop.f32.mrb[0].mxu0
    %v404 = vadd.f32 %v318, %v403
    %v405 = vpop.f32.mrb[0].mxu0
    %406 = vmatprep.mubr.bf16.mxu0 0
    %407 = vmatmul.mubr.bf16.gmra.mrb[0].mxu0 %v358
    %v408 = vpop.f32.mrb[0].mxu0
    %v409 = vadd.f32 %v323, %v408
    %v410 = vpop.f32.mrb[0].mxu0
    %v411 = vpop.f32.mrb[0].mxu0
    %v412 = vadd.f32 %v328, %v411
    %v413 = vpop.f32.mrb[0].mxu0
    %414 = vmatprep.mubr.bf16.mxu0 0
    %415 = vmatmul.mubr.bf16.gmra.mrb[0].mxu0 %v361
    %v416 = vpop.f32.mrb[0].mxu0
    %v417 = vadd.f32 %v333, %v416
    %v418 = vpop.f32.mrb[0].mxu0
    %v419 = vpop.f32.mrb[0].mxu0
    %v420 = vadd.f32 %v338, %v419
    %v421 = vpop.f32.mrb[0].mxu0
    %422 = vmatprep.mubr.bf16.mxu0 0
    %423 = vmatmul.mubr.bf16.gmra.mrb[0].mxu0 %v364
    %v424 = vpop.f32.mrb[0].mxu0
    %v425 = vadd.f32 %v343, %v424
    %v426 = vpop.f32.mrb[0].mxu0
    %v427 = vpop.f32.mrb[0].mxu0
    %v428 = vadd.f32 %v348, %v427
    %v429 = vpop.f32.mrb[0].mxu0
    %430 = vdwg.mxu0
    %v431 = vmax.f32 %v401, 0.0
    %v432 = vmax.f32 %v404, 0.0
    %v433 = vmax.f32 %v409, 0.0
    %v434 = vmax.f32 %v412, 0.0
    %v435 = vmax.f32 %v417, 0.0
    %v436 = vmax.f32 %v420, 0.0
    %v437 = vmax.f32 %v425, 0.0
    %v438 = vmax.f32 %v428, 0.0
    %v439 = vpack.c.bf16 %v432, %v431
    %v440 = vpack.c.bf16 %v434, %v433
    %v441 = vpack.c.bf16 %v436, %v435
    %v442 = vpack.c.bf16 %v438, %v437
    %s443 = sld [smem:[#allocation2]]
    %v444 = vstv %s443
    %v445 = vmul.f32 %v444, %v197
    %v446 = vmul.f32 %v444, %v198
    %v447 = vmul.f32 %v444, %v199
    %v448 = vmul.f32 %v444, %v200
    %vm449 = vcmask 523264
    %v451 = vsel %vm449, %v186, 0
    %v454 = vsel %vm449, %v187, 0
    %456 = vmatprep.subr.bf16.mxu0 0
    %457 = vmatpush1.bf16.msra.mxu0 %v439
    %458 = vmatprep.subr.bf16.mxu0 0
    %459 = vmatpush1.bf16.msra.mxu0 %v440
    %460 = vmatprep.subr.bf16.mxu0 0
    %461 = vmatpush1.bf16.msra.mxu0 %v441
    %462 = vmatprep.subr.bf16.mxu0 0
    %463 = vmatpush1.bf16.msra.mxu0 %v442
    %464 = vmatprep.subr.bf16.mxu0 0
    %465 = vmatpush1.bf16.msra.mxu0 0
    %466 = vmatprep.subr.bf16.mxu0 0
    %467 = vmatpush1.bf16.msra.mxu0 0
    %468 = vmatprep.subr.bf16.mxu0 0
    %469 = vmatpush1.bf16.msra.mxu0 0
    %470 = vmatprep.subr.bf16.mxu0 0
    %471 = vmatpush1.bf16.msra.mxu0 0
    %472 = vmatprep.subr.bf16.mxu0 0
    %473 = vmatpush1.bf16.msra.mxu0 0
    %474 = vmatprep.subr.bf16.mxu0 0
    %475 = vmatpush1.bf16.msra.mxu0 0
    %476 = vmatprep.subr.bf16.mxu0 0
    %477 = vmatpush1.bf16.msra.mxu0 0
    %478 = vmatprep.subr.bf16.mxu0 0
    %479 = vmatpush1.bf16.msra.mxu0 0
    %480 = vmatprep.subr.bf16.mxu0 0
    %481 = vmatpush1.bf16.msra.mxu0 0
    %482 = vmatprep.subr.bf16.mxu0 0
    %483 = vmatpush1.bf16.msra.mxu0 0
    %484 = vmatprep.subr.bf16.mxu0 0
    %485 = vmatpush1.bf16.msra.mxu0 0
    %486 = vmatprep.subr.bf16.mxu0 0
    %487 = vmatpush1.bf16.msra.mxu0 0
    %488 = vmatprep.mubr.bf16.mxu0 0
    %489 = vmatmul.mubr.bf16.gmra.mrb[0].mxu0 %v451
    %v490 = vpop.f32.mrb[0].mxu0
    %v491 = vadd.f32 %v445, %v490
    %v492 = vpop.f32.mrb[0].mxu0
    %v493 = vpop.f32.mrb[0].mxu0
    %v494 = vadd.f32 %v446, %v493
    %v495 = vpop.f32.mrb[0].mxu0
    %496 = vmatprep.mubr.bf16.mxu0 0
    %497 = vmatmul.mubr.bf16.gmra.mrb[0].mxu0 %v454
    %v498 = vpop.f32.mrb[0].mxu0
    %v499 = vadd.f32 %v447, %v498
    %v500 = vpop.f32.mrb[0].mxu0
    %v501 = vpop.f32.mrb[0].mxu0
    %v502 = vadd.f32 %v448, %v501
    %v503 = vpop.f32.mrb[0].mxu0
    %504 = vdwg.mxu0
    %v505 = vld [vmem:[#allocation6] sm:$0xff]
    %v506 = vld [vmem:[#allocation6 + $0x8] sm:$0xff]
    %v507 = vld [vmem:[#allocation6 + $0x10] sm:$0xff]
    %v508 = vld [vmem:[#allocation6 + $0x18] sm:$0xff]
    %v509 = vld [vmem:[#allocation6 + $0x20] sm:$0xff]
    %v510 = vld [vmem:[#allocation6 + $0x28] sm:$0xff]
    %v511 = vld [vmem:[#allocation6 + $0x30] sm:$0xff]
    %v512 = vld [vmem:[#allocation6 + $0x38] sm:$0xff]
    %v513 = vld [vmem:[#allocation6 + $0x40] sm:$0xff]
    %v514 = vld [vmem:[#allocation6 + $0x48] sm:$0xff]
    %v515 = vld [vmem:[#allocation6 + $0x50] sm:$0xff]
    %v516 = vld [vmem:[#allocation6 + $0x58] sm:$0xff]
    %v517 = vld [vmem:[#allocation6 + $0x60] sm:$0xff]
    %v518 = vld [vmem:[#allocation6 + $0x68] sm:$0xff]
    %v519 = vld [vmem:[#allocation6 + $0x70] sm:$0xff]
    %v520 = vld [vmem:[#allocation6 + $0x78] sm:$0xff]
    %v521 = vld [vmem:[%s9] sm:$0x1]
    %v523 = vlaneseq
    %v524 = vshrl.u32 %v523, 7
    %v525 = vsub.s32 0, %v524
    %v526 = vrot.slane %v521, %v525
    %528 = vmatprep.subr.mxu0 0.0
    %529 = vmatpush1.msra.mxu0 %v505
    %530 = vmatprep.subr.mxu0 0.0
    %531 = vmatpush1.msra.mxu0 %v506
    %532 = vmatprep.subr.mxu0 0.0
    %533 = vmatpush1.msra.mxu0 %v507
    %534 = vmatprep.subr.mxu0 0.0
    %535 = vmatpush1.msra.mxu0 %v508
    %536 = vmatprep.subr.mxu0 0.0
    %537 = vmatpush1.msra.mxu0 %v509
    %538 = vmatprep.subr.mxu0 0.0
    %539 = vmatpush1.msra.mxu0 %v510
    %540 = vmatprep.subr.mxu0 0.0
    %541 = vmatpush1.msra.mxu0 %v511
    %542 = vmatprep.subr.mxu0 0.0
    %543 = vmatpush1.msra.mxu0 %v512
    %544 = vmatprep.subr.mxu0 0.0
    %545 = vmatpush1.msra.mxu0 %v513
    %546 = vmatprep.subr.mxu0 0.0
    %547 = vmatpush1.msra.mxu0 %v514
    %548 = vmatprep.subr.mxu0 0.0
    %549 = vmatpush1.msra.mxu0 %v515
    %550 = vmatprep.subr.mxu0 0.0
    %551 = vmatpush1.msra.mxu0 %v516
    %552 = vmatprep.subr.mxu0 0.0
    %553 = vmatpush1.msra.mxu0 %v517
    %554 = vmatprep.subr.mxu0 0.0
    %555 = vmatpush1.msra.mxu0 %v518
    %556 = vmatprep.subr.mxu0 0.0
    %557 = vmatpush1.msra.mxu0 %v519
    %558 = vmatprep.subr.mxu0 0.0
    %559 = vmatpush1.msra.mxu0 %v520
    %560 = vmatprep.subr.mxu0 0.0
    %561 = vmatpush1.msra.mxu0 0.0
    %562 = vmatprep.subr.mxu0 0.0
    %563 = vmatpush1.msra.mxu0 0.0
    %564 = vmatprep.subr.mxu0 0.0
    %565 = vmatpush1.msra.mxu0 0.0
    %566 = vmatprep.subr.mxu0 0.0
    %567 = vmatpush1.msra.mxu0 0.0
    %568 = vmatprep.subr.mxu0 0.0
    %569 = vmatpush1.msra.mxu0 0.0
    %570 = vmatprep.subr.mxu0 0.0
    %571 = vmatpush1.msra.mxu0 0.0
    %572 = vmatprep.subr.mxu0 0.0
    %573 = vmatpush1.msra.mxu0 0.0
    %574 = vmatprep.subr.mxu0 0.0
    %575 = vmatpush1.msra.mxu0 0.0
    %576 = vmatprep.subr.mxu0 0.0
    %577 = vmatpush1.msra.mxu0 0.0
    %578 = vmatprep.subr.mxu0 0.0
    %579 = vmatpush1.msra.mxu0 0.0
    %580 = vmatprep.subr.mxu0 0.0
    %581 = vmatpush1.msra.mxu0 0.0
    %582 = vmatprep.subr.mxu0 0.0
    %583 = vmatpush1.msra.mxu0 0.0
    %584 = vmatprep.subr.mxu0 0.0
    %585 = vmatpush1.msra.mxu0 0.0
    %586 = vmatprep.subr.mxu0 0.0
    %587 = vmatpush1.msra.mxu0 0.0
    %588 = vmatprep.subr.mxu0 0.0
    %589 = vmatpush1.msra.mxu0 0.0
    %590 = vmatprep.subr.mxu0 0.0
    %591 = vmatpush1.msra.mxu0 0.0
    %592 = vmatprep.mubr.f32.mxu0 0.0
    %593 = vmatmul.mubr.f32.gmra.mrb[0].mxu0 %v491
    %v594 = vpop.f32.mrb[0].mxu0
    %v595 = vadd.f32 %v526, %v594
    %v596 = vpop.f32.mrb[0].mxu0
    %597 = vmatprep.mubr.f32.mxu0 0.0
    %598 = vmatmul.mubr.f32.gmra.mrb[0].mxu0 %v494
    %v599 = vpop.f32.mrb[0].mxu0
    %v600 = vadd.f32 %v526, %v599
    %v601 = vpop.f32.mrb[0].mxu0
    %602 = vmatprep.mubr.f32.mxu0 0.0
    %603 = vmatmul.mubr.f32.gmra.mrb[0].mxu0 %v499
    %v604 = vpop.f32.mrb[0].mxu0
    %v605 = vadd.f32 %v526, %v604
    %v606 = vpop.f32.mrb[0].mxu0
    %607 = vmatprep.mubr.f32.mxu0 0.0
    %608 = vmatmul.mubr.f32.gmra.mrb[0].mxu0 %v502
    %v609 = vpop.f32.mrb[0].mxu0
    %v610 = vadd.f32 %v526, %v609
    %v611 = vpop.f32.mrb[0].mxu0
    %612 = vdwg.mxu0
    %v614 = vsel %vm353, 1.0, 0
    %616 = vmatprep.subr.mxu0 0.0
    %617 = vmatpush1.msra.mxu0 %v595
    %618 = vmatprep.subr.mxu0 0.0
    %619 = vmatpush1.msra.mxu0 %v600
    %620 = vmatprep.subr.mxu0 0.0
    %621 = vmatpush1.msra.mxu0 %v605
    %622 = vmatprep.subr.mxu0 0.0
    %623 = vmatpush1.msra.mxu0 %v610
    %624 = vmatprep.subr.mxu0 0.0
    %625 = vmatpush1.msra.mxu0 0.0
    %626 = vmatprep.subr.mxu0 0.0
    %627 = vmatpush1.msra.mxu0 0.0
    %628 = vmatprep.subr.mxu0 0.0
    %629 = vmatpush1.msra.mxu0 0.0
    %630 = vmatprep.subr.mxu0 0.0
    %631 = vmatpush1.msra.mxu0 0.0
    %632 = vmatprep.subr.mxu0 0.0
    %633 = vmatpush1.msra.mxu0 0.0
    %634 = vmatprep.subr.mxu0 0.0
    %635 = vmatpush1.msra.mxu0 0.0
    %636 = vmatprep.subr.mxu0 0.0
    %637 = vmatpush1.msra.mxu0 0.0
    %638 = vmatprep.subr.mxu0 0.0
    %639 = vmatpush1.msra.mxu0 0.0
    %640 = vmatprep.subr.mxu0 0.0
    %641 = vmatpush1.msra.mxu0 0.0
    %642 = vmatprep.subr.mxu0 0.0
    %643 = vmatpush1.msra.mxu0 0.0
    %644 = vmatprep.subr.mxu0 0.0
    %645 = vmatpush1.msra.mxu0 0.0
    %646 = vmatprep.subr.mxu0 0.0
    %647 = vmatpush1.msra.mxu0 0.0
    %648 = vmatprep.subr.mxu0 0.0
    %649 = vmatpush1.msra.mxu0 0.0
    %650 = vmatprep.subr.mxu0 0.0
    %651 = vmatpush1.msra.mxu0 0.0
    %652 = vmatprep.subr.mxu0 0.0
    %653 = vmatpush1.msra.mxu0 0.0
    %654 = vmatprep.subr.mxu0 0.0
    %655 = vmatpush1.msra.mxu0 0.0
    %656 = vmatprep.subr.mxu0 0.0
    %657 = vmatpush1.msra.mxu0 0.0
    %658 = vmatprep.subr.mxu0 0.0
    %659 = vmatpush1.msra.mxu0 0.0
    %660 = vmatprep.subr.mxu0 0.0
    %661 = vmatpush1.msra.mxu0 0.0
    %662 = vmatprep.subr.mxu0 0.0
    %663 = vmatpush1.msra.mxu0 0.0
    %664 = vmatprep.subr.mxu0 0.0
    %665 = vmatpush1.msra.mxu0 0.0
    %666 = vmatprep.subr.mxu0 0.0
    %667 = vmatpush1.msra.mxu0 0.0
    %668 = vmatprep.subr.mxu0 0.0
    %669 = vmatpush1.msra.mxu0 0.0
    %670 = vmatprep.subr.mxu0 0.0
    %671 = vmatpush1.msra.mxu0 0.0
    %672 = vmatprep.subr.mxu0 0.0
    %673 = vmatpush1.msra.mxu0 0.0
    %674 = vmatprep.subr.mxu0 0.0
    %675 = vmatpush1.msra.mxu0 0.0
    %676 = vmatprep.subr.mxu0 0.0
    %677 = vmatpush1.msra.mxu0 0.0
    %678 = vmatprep.subr.mxu0 0.0
    %679 = vmatpush1.msra.mxu0 0.0
    %680 = vmatprep.mubr.f32.mxu0 0.0
    %681 = vmatmul.mubr.f32.gmra.mrb[0].mxu0 %v614
    %v682 = vpop.f32.mrb[0].mxu0
    %v683 = vadd.f32 0.0, %v682
    %v684 = vpop.f32.mrb[0].mxu0
    %685 = vdwg.mxu0
    %v686 = vmul.f32 %v683, 0.03125
    %v687 = vlaneseq
    %v688 = vshrl.u32 %v687, 7
    %v689 = vsub.s32 0, %v688
    %v690 = vrot.slane %v686, %v689
    %v691 = vsub.f32 %v595, %v690
    %v692 = vsub.f32 %v600, %v690
    %v693 = vsub.f32 %v605, %v690
    %v694 = vsub.f32 %v610, %v690
    %v695 = vmul.f32 %v691, %v691
    %v696 = vmul.f32 %v692, %v692
    %v697 = vmul.f32 %v693, %v693
    %v698 = vmul.f32 %v694, %v694
    %699 = vmatprep.subr.mxu0 0.0
    %700 = vmatpush1.msra.mxu0 %v695
    %701 = vmatprep.subr.mxu0 0.0
    %702 = vmatpush1.msra.mxu0 %v696
    %703 = vmatprep.subr.mxu0 0.0
    %704 = vmatpush1.msra.mxu0 %v697
    %705 = vmatprep.subr.mxu0 0.0
    %706 = vmatpush1.msra.mxu0 %v698
    %707 = vmatprep.subr.mxu0 0.0
    %708 = vmatpush1.msra.mxu0 0.0
    %709 = vmatprep.subr.mxu0 0.0
    %710 = vmatpush1.msra.mxu0 0.0
    %711 = vmatprep.subr.mxu0 0.0
    %712 = vmatpush1.msra.mxu0 0.0
    %713 = vmatprep.subr.mxu0 0.0
    %714 = vmatpush1.msra.mxu0 0.0
    %715 = vmatprep.subr.mxu0 0.0
    %716 = vmatpush1.msra.mxu0 0.0
    %717 = vmatprep.subr.mxu0 0.0
    %718 = vmatpush1.msra.mxu0 0.0
    %719 = vmatprep.subr.mxu0 0.0
    %720 = vmatpush1.msra.mxu0 0.0
    %721 = vmatprep.subr.mxu0 0.0
    %722 = vmatpush1.msra.mxu0 0.0
    %723 = vmatprep.subr.mxu0 0.0
    %724 = vmatpush1.msra.mxu0 0.0
    %725 = vmatprep.subr.mxu0 0.0
    %726 = vmatpush1.msra.mxu0 0.0
    %727 = vmatprep.subr.mxu0 0.0
    %728 = vmatpush1.msra.mxu0 0.0
    %729 = vmatprep.subr.mxu0 0.0
    %730 = vmatpush1.msra.mxu0 0.0
    %731 = vmatprep.subr.mxu0 0.0
    %732 = vmatpush1.msra.mxu0 0.0
    %733 = vmatprep.subr.mxu0 0.0
    %734 = vmatpush1.msra.mxu0 0.0
    %735 = vmatprep.subr.mxu0 0.0
    %736 = vmatpush1.msra.mxu0 0.0
    %737 = vmatprep.subr.mxu0 0.0
    %738 = vmatpush1.msra.mxu0 0.0
    %739 = vmatprep.subr.mxu0 0.0
    %740 = vmatpush1.msra.mxu0 0.0
    %741 = vmatprep.subr.mxu0 0.0
    %742 = vmatpush1.msra.mxu0 0.0
    %743 = vmatprep.subr.mxu0 0.0
    %744 = vmatpush1.msra.mxu0 0.0
    %745 = vmatprep.subr.mxu0 0.0
    %746 = vmatpush1.msra.mxu0 0.0
    %747 = vmatprep.subr.mxu0 0.0
    %748 = vmatpush1.msra.mxu0 0.0
    %749 = vmatprep.subr.mxu0 0.0
    %750 = vmatpush1.msra.mxu0 0.0
    %751 = vmatprep.subr.mxu0 0.0
    %752 = vmatpush1.msra.mxu0 0.0
    %753 = vmatprep.subr.mxu0 0.0
    %754 = vmatpush1.msra.mxu0 0.0
    %755 = vmatprep.subr.mxu0 0.0
    %756 = vmatpush1.msra.mxu0 0.0
    %757 = vmatprep.subr.mxu0 0.0
    %758 = vmatpush1.msra.mxu0 0.0
    %759 = vmatprep.subr.mxu0 0.0
    %760 = vmatpush1.msra.mxu0 0.0
    %761 = vmatprep.subr.mxu0 0.0
    %762 = vmatpush1.msra.mxu0 0.0
    %763 = vmatprep.mubr.f32.mxu0 0.0
    %764 = vmatmul.mubr.f32.gmra.mrb[0].mxu0 %v614
    %v765 = vpop.f32.mrb[0].mxu0
    %v766 = vadd.f32 0.0, %v765
    %v767 = vpop.f32.mrb[0].mxu0
    %768 = vdwg.mxu0
    %v769 = vmul.f32 %v766, 0.03125
    %v770 = vadd.f32 %v769, 1e-05
    %v771 = vrsqrt.pop %v770
    %v772 = vlaneseq
    %v773 = vshrl.u32 %v772, 7
    %v774 = vsub.s32 0, %v773
    %v775 = vrot.slane %v771, %v774
    %v776 = vmul.f32 %v691, %v775
    %v777 = vmul.f32 %v692, %v775
    %v778 = vmul.f32 %v693, %v775
    %v779 = vmul.f32 %v694, %v775
    %v780 = vld [vmem:[%s10] sm:$0x1]
    %v782 = vlaneseq
    %v783 = vshrl.u32 %v782, 7
    %v784 = vsub.s32 0, %v783
    %v785 = vrot.slane %v780, %v784
    %v787 = vmul.f32 %v776, %v785
    %v788 = vmul.f32 %v777, %v785
    %v789 = vmul.f32 %v778, %v785
    %v790 = vmul.f32 %v779, %v785
    %v791 = vld [vmem:[%s11] sm:$0x1]
    %v793 = vlaneseq
    %v794 = vshrl.u32 %v793, 7
    %v795 = vsub.s32 0, %v794
    %v796 = vrot.slane %v791, %v795
    %v798 = vadd.f32 %v787, %v796
    %v799 = vadd.f32 %v788, %v796
    %v800 = vadd.f32 %v789, %v796
    %v801 = vadd.f32 %v790, %v796
    %v802 = vmax.f32 %v798, 0.0
    %v803 = vmax.f32 %v799, 0.0
    %v804 = vmax.f32 %v800, 0.0
    %v805 = vmax.f32 %v801, 0.0
    %v806 = vld [vmem:[#allocation7] sm:$0xff]
    %v807 = vld [vmem:[#allocation7 + $0x8] sm:$0xff]
    %v808 = vld [vmem:[#allocation7 + $0x10] sm:$0xff]
    %v809 = vld [vmem:[#allocation7 + $0x18] sm:$0xff]
    %v810 = vld [vmem:[#allocation7 + $0x20] sm:$0xff]
    %v811 = vld [vmem:[#allocation7 + $0x28] sm:$0xff]
    %v812 = vld [vmem:[#allocation7 + $0x30] sm:$0xff]
    %v813 = vld [vmem:[#allocation7 + $0x38] sm:$0xff]
    %v814 = vld [vmem:[#allocation7 + $0x40] sm:$0xff]
    %v815 = vld [vmem:[#allocation7 + $0x48] sm:$0xff]
    %v816 = vld [vmem:[#allocation7 + $0x50] sm:$0xff]
    %v817 = vld [vmem:[#allocation7 + $0x58] sm:$0xff]
    %v818 = vld [vmem:[#allocation7 + $0x60] sm:$0xff]
    %v819 = vld [vmem:[#allocation7 + $0x68] sm:$0xff]
    %v820 = vld [vmem:[#allocation7 + $0x70] sm:$0xff]
    %v821 = vld [vmem:[#allocation7 + $0x78] sm:$0xff]
    %v822 = vld [vmem:[%s13] sm:$0x1]
    %v824 = vlaneseq
    %v825 = vshrl.u32 %v824, 7
    %v826 = vsub.s32 0, %v825
    %v827 = vrot.slane %v822, %v826
    %829 = vmatprep.subr.mxu0 0.0
    %830 = vmatpush1.msra.mxu0 %v806
    %831 = vmatprep.subr.mxu0 0.0
    %832 = vmatpush1.msra.mxu0 %v807
    %833 = vmatprep.subr.mxu0 0.0
    %834 = vmatpush1.msra.mxu0 %v808
    %835 = vmatprep.subr.mxu0 0.0
    %836 = vmatpush1.msra.mxu0 %v809
    %837 = vmatprep.subr.mxu0 0.0
    %838 = vmatpush1.msra.mxu0 %v810
    %839 = vmatprep.subr.mxu0 0.0
    %840 = vmatpush1.msra.mxu0 %v811
    %841 = vmatprep.subr.mxu0 0.0
    %842 = vmatpush1.msra.mxu0 %v812
    %843 = vmatprep.subr.mxu0 0.0
    %844 = vmatpush1.msra.mxu0 %v813
    %845 = vmatprep.subr.mxu0 0.0
    %846 = vmatpush1.msra.mxu0 %v814
    %847 = vmatprep.subr.mxu0 0.0
    %848 = vmatpush1.msra.mxu0 %v815
    %849 = vmatprep.subr.mxu0 0.0
    %850 = vmatpush1.msra.mxu0 %v816
    %851 = vmatprep.subr.mxu0 0.0
    %852 = vmatpush1.msra.mxu0 %v817
    %853 = vmatprep.subr.mxu0 0.0
    %854 = vmatpush1.msra.mxu0 %v818
    %855 = vmatprep.subr.mxu0 0.0
    %856 = vmatpush1.msra.mxu0 %v819
    %857 = vmatprep.subr.mxu0 0.0
    %858 = vmatpush1.msra.mxu0 %v820
    %859 = vmatprep.subr.mxu0 0.0
    %860 = vmatpush1.msra.mxu0 %v821
    %861 = vmatprep.subr.mxu0 0.0
    %862 = vmatpush1.msra.mxu0 0.0
    %863 = vmatprep.subr.mxu0 0.0
    %864 = vmatpush1.msra.mxu0 0.0
    %865 = vmatprep.subr.mxu0 0.0
    %866 = vmatpush1.msra.mxu0 0.0
    %867 = vmatprep.subr.mxu0 0.0
    %868 = vmatpush1.msra.mxu0 0.0
    %869 = vmatprep.subr.mxu0 0.0
    %870 = vmatpush1.msra.mxu0 0.0
    %871 = vmatprep.subr.mxu0 0.0
    %872 = vmatpush1.msra.mxu0 0.0
    %873 = vmatprep.subr.mxu0 0.0
    %874 = vmatpush1.msra.mxu0 0.0
    %875 = vmatprep.subr.mxu0 0.0
    %876 = vmatpush1.msra.mxu0 0.0
    %877 = vmatprep.subr.mxu0 0.0
    %878 = vmatpush1.msra.mxu0 0.0
    %879 = vmatprep.subr.mxu0 0.0
    %880 = vmatpush1.msra.mxu0 0.0
    %881 = vmatprep.subr.mxu0 0.0
    %882 = vmatpush1.msra.mxu0 0.0
    %883 = vmatprep.subr.mxu0 0.0
    %884 = vmatpush1.msra.mxu0 0.0
    %885 = vmatprep.subr.mxu0 0.0
    %886 = vmatpush1.msra.mxu0 0.0
    %887 = vmatprep.subr.mxu0 0.0
    %888 = vmatpush1.msra.mxu0 0.0
    %889 = vmatprep.subr.mxu0 0.0
    %890 = vmatpush1.msra.mxu0 0.0
    %891 = vmatprep.subr.mxu0 0.0
    %892 = vmatpush1.msra.mxu0 0.0
    %893 = vmatprep.mubr.f32.mxu0 0.0
    %894 = vmatmul.mubr.f32.gmra.mrb[0].mxu0 %v802
    %v895 = vpop.f32.mrb[0].mxu0
    %v896 = vadd.f32 %v827, %v895
    %v897 = vpop.f32.mrb[0].mxu0
    %898 = vmatprep.mubr.f32.mxu0 0.0
    %899 = vmatmul.mubr.f32.gmra.mrb[0].mxu0 %v803
    %v900 = vpop.f32.mrb[0].mxu0
    %v901 = vadd.f32 %v827, %v900
    %v902 = vpop.f32.mrb[0].mxu0
    %903 = vmatprep.mubr.f32.mxu0 0.0
    %904 = vmatmul.mubr.f32.gmra.mrb[0].mxu0 %v804
    %v905 = vpop.f32.mrb[0].mxu0
    %v906 = vadd.f32 %v827, %v905
    %v907 = vpop.f32.mrb[0].mxu0
    %908 = vmatprep.mubr.f32.mxu0 0.0
    %909 = vmatmul.mubr.f32.gmra.mrb[0].mxu0 %v805
    %v910 = vpop.f32.mrb[0].mxu0
    %v911 = vadd.f32 %v827, %v910
    %v912 = vpop.f32.mrb[0].mxu0
    %913 = vdwg.mxu0
    %v914 = vmax.f32 %v896, 0.0
    %v915 = vmax.f32 %v901, 0.0
    %v916 = vmax.f32 %v906, 0.0
    %v917 = vmax.f32 %v911, 0.0
    %v918 = vld [vmem:[%s14] sm:$0x1]
    %v920 = vlaneseq
    %v921 = vshrl.u32 %v920, 7
    %v922 = vsub.s32 0, %v921
    %v923 = vrot.slane %v918, %v922
    %v925 = vmul.f32 %v914, %v923
    %v926 = vmul.f32 %v915, %v923
    %v927 = vmul.f32 %v916, %v923
    %v928 = vmul.f32 %v917, %v923
    %v929 = vld [vmem:[%s15] sm:$0x1]
    %v931 = vlaneseq
    %v932 = vshrl.u32 %v931, 7
    %v933 = vsub.s32 0, %v932
    %v934 = vrot.slane %v929, %v933
    %v936 = vadd.f32 %v925, %v934
    %v937 = vadd.f32 %v926, %v934
    %v938 = vadd.f32 %v927, %v934
    %v939 = vadd.f32 %v928, %v934
    %v940 = vmax.f32 %v936, 0.0
    %v941 = vmax.f32 %v937, 0.0
    %v942 = vmax.f32 %v938, 0.0
    %v943 = vmax.f32 %v939, 0.0
    %v944 = vadd.f32 %v940, %v197
    %v945 = vadd.f32 %v941, %v198
    %v946 = vadd.f32 %v942, %v199
    %v947 = vadd.f32 %v943, %v200
    %s948 = scalar_lea.vmem %s6, 8
    %v949 = vld [vmem:[%s948] sm:$0x3f]
    %s950 = scalar_lea.vmem %s7, 1
    %v951 = vld [vmem:[%s950] sm:$0x1]
    %v953 = vlaneseq
    %v954 = vshrl.u32 %v953, 7
    %v955 = vsub.s32 0, %v954
    %v956 = vrot.slane %v951, %v955
    %v959 = vsel %vm242, %v949, 0
    %961 = vmatprep.subr.mxu0 0.0
    %962 = vmatpush1.msra.mxu0 %v959
    %963 = vmatprep.subr.mxu0 0.0
    %964 = vmatpush1.msra.mxu0 0.0
    %965 = vmatprep.subr.mxu0 0.0
    %966 = vmatpush1.msra.mxu0 0.0
    %967 = vmatprep.subr.mxu0 0.0
    %968 = vmatpush1.msra.mxu0 0.0
    %969 = vmatprep.subr.mxu0 0.0
    %970 = vmatpush1.msra.mxu0 0.0
    %971 = vmatprep.subr.mxu0 0.0
    %972 = vmatpush1.msra.mxu0 0.0
    %973 = vmatprep.subr.mxu0 0.0
    %974 = vmatpush1.msra.mxu0 0.0
    %975 = vmatprep.subr.mxu0 0.0
    %976 = vmatpush1.msra.mxu0 0.0
    %977 = vmatprep.subr.mxu0 0.0
    %978 = vmatpush1.msra.mxu0 0.0
    %979 = vmatprep.subr.mxu0 0.0
    %980 = vmatpush1.msra.mxu0 0.0
    %981 = vmatprep.subr.mxu0 0.0
    %982 = vmatpush1.msra.mxu0 0.0
    %983 = vmatprep.subr.mxu0 0.0
    %984 = vmatpush1.msra.mxu0 0.0
    %985 = vmatprep.subr.mxu0 0.0
    %986 = vmatpush1.msra.mxu0 0.0
    %987 = vmatprep.subr.mxu0 0.0
    %988 = vmatpush1.msra.mxu0 0.0
    %989 = vmatprep.subr.mxu0 0.0
    %990 = vmatpush1.msra.mxu0 0.0
    %991 = vmatprep.subr.mxu0 0.0
    %992 = vmatpush1.msra.mxu0 0.0
    %993 = vmatprep.subr.mxu0 0.0
    %994 = vmatpush1.msra.mxu0 0.0
    %995 = vmatprep.subr.mxu0 0.0
    %996 = vmatpush1.msra.mxu0 0.0
    %997 = vmatprep.subr.mxu0 0.0
    %998 = vmatpush1.msra.mxu0 0.0
    %999 = vmatprep.subr.mxu0 0.0
    %1000 = vmatpush1.msra.mxu0 0.0
    %1001 = vmatprep.subr.mxu0 0.0
    %1002 = vmatpush1.msra.mxu0 0.0
    %1003 = vmatprep.subr.mxu0 0.0
    %1004 = vmatpush1.msra.mxu0 0.0
    %1005 = vmatprep.subr.mxu0 0.0
    %1006 = vmatpush1.msra.mxu0 0.0
    %1007 = vmatprep.subr.mxu0 0.0
    %1008 = vmatpush1.msra.mxu0 0.0
    %1009 = vmatprep.subr.mxu0 0.0
    %1010 = vmatpush1.msra.mxu0 0.0
    %1011 = vmatprep.subr.mxu0 0.0
    %1012 = vmatpush1.msra.mxu0 0.0
    %1013 = vmatprep.subr.mxu0 0.0
    %1014 = vmatpush1.msra.mxu0 0.0
    %1015 = vmatprep.subr.mxu0 0.0
    %1016 = vmatpush1.msra.mxu0 0.0
    %1017 = vmatprep.subr.mxu0 0.0
    %1018 = vmatpush1.msra.mxu0 0.0
    %1019 = vmatprep.subr.mxu0 0.0
    %1020 = vmatpush1.msra.mxu0 0.0
    %1021 = vmatprep.subr.mxu0 0.0
    %1022 = vmatpush1.msra.mxu0 0.0
    %1023 = vmatprep.subr.mxu0 0.0
    %1024 = vmatpush1.msra.mxu0 0.0
    %1025 = vmatprep.mubr.f32.mxu0 0.0
    %1026 = vmatmul.mubr.f32.gmra.mrb[0].mxu0 %v219
    %v1027 = vpop.f32.mrb[0].mxu0
    %v1028 = vadd.f32 %v956, %v1027
    %v1029 = vpop.f32.mrb[0].mxu0
    %1030 = vmatprep.mubr.f32.mxu0 0.0
    %1031 = vmatmul.mubr.f32.gmra.mrb[0].mxu0 %v222
    %v1032 = vpop.f32.mrb[0].mxu0
    %v1033 = vadd.f32 %v956, %v1032
    %v1034 = vpop.f32.mrb[0].mxu0
    %1035 = vmatprep.mubr.f32.mxu0 0.0
    %1036 = vmatmul.mubr.f32.gmra.mrb[0].mxu0 %v225
    %v1037 = vpop.f32.mrb[0].mxu0
    %v1038 = vadd.f32 %v956, %v1037
    %v1039 = vpop.f32.mrb[0].mxu0
    %1040 = vmatprep.mubr.f32.mxu0 0.0
    %1041 = vmatmul.mubr.f32.gmra.mrb[0].mxu0 %v228
    %v1042 = vpop.f32.mrb[0].mxu0
    %v1043 = vadd.f32 %v956, %v1042
    %v1044 = vpop.f32.mrb[0].mxu0
    %1045 = vmatprep.mubr.f32.mxu0 0.0
    %1046 = vmatmul.mubr.f32.gmra.mrb[0].mxu0 %v231
    %v1047 = vpop.f32.mrb[0].mxu0
    %v1048 = vadd.f32 %v956, %v1047
    %v1049 = vpop.f32.mrb[0].mxu0
    %1050 = vmatprep.mubr.f32.mxu0 0.0
    %1051 = vmatmul.mubr.f32.gmra.mrb[0].mxu0 %v234
    %v1052 = vpop.f32.mrb[0].mxu0
    %v1053 = vadd.f32 %v956, %v1052
    %v1054 = vpop.f32.mrb[0].mxu0
    %1055 = vmatprep.mubr.f32.mxu0 0.0
    %1056 = vmatmul.mubr.f32.gmra.mrb[0].mxu0 %v237
    %v1057 = vpop.f32.mrb[0].mxu0
    %v1058 = vadd.f32 %v956, %v1057
    %v1059 = vpop.f32.mrb[0].mxu0
    %1060 = vmatprep.mubr.f32.mxu0 0.0
    %1061 = vmatmul.mubr.f32.gmra.mrb[0].mxu0 %v240
    %v1062 = vpop.f32.mrb[0].mxu0
    %v1063 = vadd.f32 %v956, %v1062
    %v1064 = vpop.f32.mrb[0].mxu0
    %1065 = vdwg.mxu0
    %v1066 = vpack.c.bf16 %v945, %v944
    %v1067 = vpack.c.bf16 %v947, %v946
    %1068 = vmatprep.subr.bf16.mxu0 0
    %1069 = vmatpush1.bf16.msra.mxu0 %v1066
    %1070 = vmatprep.subr.bf16.mxu0 0
    %1071 = vmatpush1.bf16.msra.mxu0 %v1067
    %1072 = vmatprep.subr.bf16.mxu0 0
    %1073 = vmatpush1.bf16.msra.mxu0 0
    %1074 = vmatprep.subr.bf16.mxu0 0
    %1075 = vmatpush1.bf16.msra.mxu0 0
    %1076 = vmatprep.subr.bf16.mxu0 0
    %1077 = vmatpush1.bf16.msra.mxu0 0
    %1078 = vmatprep.subr.bf16.mxu0 0
    %1079 = vmatpush1.bf16.msra.mxu0 0
    %1080 = vmatprep.subr.bf16.mxu0 0
    %1081 = vmatpush1.bf16.msra.mxu0 0
    %1082 = vmatprep.subr.bf16.mxu0 0
    %1083 = vmatpush1.bf16.msra.mxu0 0
    %1084 = vmatprep.subr.bf16.mxu0 0
    %1085 = vmatpush1.bf16.msra.mxu0 0
    %1086 = vmatprep.subr.bf16.mxu0 0
    %1087 = vmatpush1.bf16.msra.mxu0 0
    %1088 = vmatprep.subr.bf16.mxu0 0
    %1089 = vmatpush1.bf16.msra.mxu0 0
    %1090 = vmatprep.subr.bf16.mxu0 0
    %1091 = vmatpush1.bf16.msra.mxu0 0
    %1092 = vmatprep.subr.bf16.mxu0 0
    %1093 = vmatpush1.bf16.msra.mxu0 0
    %1094 = vmatprep.subr.bf16.mxu0 0
    %1095 = vmatpush1.bf16.msra.mxu0 0
    %1096 = vmatprep.subr.bf16.mxu0 0
    %1097 = vmatpush1.bf16.msra.mxu0 0
    %1098 = vmatprep.subr.bf16.mxu0 0
    %1099 = vmatpush1.bf16.msra.mxu0 0
    %1100 = vmatprep.mubr.bf16.mxu0 0
    %1101 = vmatmul.mubr.bf16.gmra.mrb[0].mxu0 %v355
    %v1102 = vpop.f32.mrb[0].mxu0
    %v1103 = vadd.f32 %v1028, %v1102
    %v1104 = vpop.f32.mrb[0].mxu0
    %v1105 = vpop.f32.mrb[0].mxu0
    %v1106 = vadd.f32 %v1033, %v1105
    %v1107 = vpop.f32.mrb[0].mxu0
    %1108 = vmatprep.mubr.bf16.mxu0 0
    %1109 = vmatmul.mubr.bf16.gmra.mrb[0].mxu0 %v358
    %v1110 = vpop.f32.mrb[0].mxu0
    %v1111 = vadd.f32 %v1038, %v1110
    %v1112 = vpop.f32.mrb[0].mxu0
    %v1113 = vpop.f32.mrb[0].mxu0
    %v1114 = vadd.f32 %v1043, %v1113
    %v1115 = vpop.f32.mrb[0].mxu0
    %1116 = vmatprep.mubr.bf16.mxu0 0
    %1117 = vmatmul.mubr.bf16.gmra.mrb[0].mxu0 %v361
    %v1118 = vpop.f32.mrb[0].mxu0
    %v1119 = vadd.f32 %v1048, %v1118
    %v1120 = vpop.f32.mrb[0].mxu0
    %v1121 = vpop.f32.mrb[0].mxu0
    %v1122 = vadd.f32 %v1053, %v1121
    %v1123 = vpop.f32.mrb[0].mxu0
    %1124 = vmatprep.mubr.bf16.mxu0 0
    %1125 = vmatmul.mubr.bf16.gmra.mrb[0].mxu0 %v364
    %v1126 = vpop.f32.mrb[0].mxu0
    %v1127 = vadd.f32 %v1058, %v1126
    %v1128 = vpop.f32.mrb[0].mxu0
    %v1129 = vpop.f32.mrb[0].mxu0
    %v1130 = vadd.f32 %v1063, %v1129
    %v1131 = vpop.f32.mrb[0].mxu0
    %1132 = vdwg.mxu0
    %v1133 = vmax.f32 %v1103, 0.0
    %v1134 = vmax.f32 %v1106, 0.0
    %v1135 = vmax.f32 %v1111, 0.0
    %v1136 = vmax.f32 %v1114, 0.0
    %v1137 = vmax.f32 %v1119, 0.0
    %v1138 = vmax.f32 %v1122, 0.0
    %v1139 = vmax.f32 %v1127, 0.0
    %v1140 = vmax.f32 %v1130, 0.0
    %v1141 = vpack.c.bf16 %v1134, %v1133
    %v1142 = vpack.c.bf16 %v1136, %v1135
    %v1143 = vpack.c.bf16 %v1138, %v1137
    %v1144 = vpack.c.bf16 %v1140, %v1139
    %s1145 = sld [smem:[#allocation2 + $0x1]]
    %v1146 = vstv %s1145
    %v1147 = vmul.f32 %v1146, %v944
    %v1148 = vmul.f32 %v1146, %v945
    %v1149 = vmul.f32 %v1146, %v946
    %v1150 = vmul.f32 %v1146, %v947
    %1151 = vmatprep.subr.bf16.mxu0 0
    %1152 = vmatpush1.bf16.msra.mxu0 %v1141
    %1153 = vmatprep.subr.bf16.mxu0 0
    %1154 = vmatpush1.bf16.msra.mxu0 %v1142
    %1155 = vmatprep.subr.bf16.mxu0 0
    %1156 = vmatpush1.bf16.msra.mxu0 %v1143
    %1157 = vmatprep.subr.bf16.mxu0 0
    %1158 = vmatpush1.bf16.msra.mxu0 %v1144
    %1159 = vmatprep.subr.bf16.mxu0 0
    %1160 = vmatpush1.bf16.msra.mxu0 0
    %1161 = vmatprep.subr.bf16.mxu0 0
    %1162 = vmatpush1.bf16.msra.mxu0 0
    %1163 = vmatprep.subr.bf16.mxu0 0
    %1164 = vmatpush1.bf16.msra.mxu0 0
    %1165 = vmatprep.subr.bf16.mxu0 0
    %1166 = vmatpush1.bf16.msra.mxu0 0
    %1167 = vmatprep.subr.bf16.mxu0 0
    %1168 = vmatpush1.bf16.msra.mxu0 0
    %1169 = vmatprep.subr.bf16.mxu0 0
    %1170 = vmatpush1.bf16.msra.mxu0 0
    %1171 = vmatprep.subr.bf16.mxu0 0
    %1172 = vmatpush1.bf16.msra.mxu0 0
    %1173 = vmatprep.subr.bf16.mxu0 0
    %1174 = vmatpush1.bf16.msra.mxu0 0
    %1175 = vmatprep.subr.bf16.mxu0 0
    %1176 = vmatpush1.bf16.msra.mxu0 0
    %1177 = vmatprep.subr.bf16.mxu0 0
    %1178 = vmatpush1.bf16.msra.mxu0 0
    %1179 = vmatprep.subr.bf16.mxu0 0
    %1180 = vmatpush1.bf16.msra.mxu0 0
    %1181 = vmatprep.subr.bf16.mxu0 0
    %1182 = vmatpush1.bf16.msra.mxu0 0
    %1183 = vmatprep.mubr.bf16.mxu0 0
    %1184 = vmatmul.mubr.bf16.gmra.mrb[0].mxu0 %v451
    %v1185 = vpop.f32.mrb[0].mxu0
    %v1186 = vadd.f32 %v1147, %v1185
    %v1187 = vpop.f32.mrb[0].mxu0
    %v1188 = vpop.f32.mrb[0].mxu0
    %v1189 = vadd.f32 %v1148, %v1188
    %v1190 = vpop.f32.mrb[0].mxu0
    %1191 = vmatprep.mubr.bf16.mxu0 0
    %1192 = vmatmul.mubr.bf16.gmra.mrb[0].mxu0 %v454
    %v1193 = vpop.f32.mrb[0].mxu0
    %v1194 = vadd.f32 %v1149, %v1193
    %v1195 = vpop.f32.mrb[0].mxu0
    %v1196 = vpop.f32.mrb[0].mxu0
    %v1197 = vadd.f32 %v1150, %v1196
    %v1198 = vpop.f32.mrb[0].mxu0
    %1199 = vdwg.mxu0
    %s1200 = scalar_lea.vmem [#allocation6], 128
    %v1201 = vld [vmem:[%s1200] sm:$0xff]
    %v1202 = vld [vmem:[%s1200 + $0x8] sm:$0xff]
    %v1203 = vld [vmem:[%s1200 + $0x10] sm:$0xff]
    %v1204 = vld [vmem:[%s1200 + $0x18] sm:$0xff]
    %v1205 = vld [vmem:[%s1200 + $0x20] sm:$0xff]
    %v1206 = vld [vmem:[%s1200 + $0x28] sm:$0xff]
    %v1207 = vld [vmem:[%s1200 + $0x30] sm:$0xff]
    %v1208 = vld [vmem:[%s1200 + $0x38] sm:$0xff]
    %v1209 = vld [vmem:[%s1200 + $0x40] sm:$0xff]
    %v1210 = vld [vmem:[%s1200 + $0x48] sm:$0xff]
    %v1211 = vld [vmem:[%s1200 + $0x50] sm:$0xff]
    %v1212 = vld [vmem:[%s1200 + $0x58] sm:$0xff]
    %v1213 = vld [vmem:[%s1200 + $0x60] sm:$0xff]
    %v1214 = vld [vmem:[%s1200 + $0x68] sm:$0xff]
    %v1215 = vld [vmem:[%s1200 + $0x70] sm:$0xff]
    %v1216 = vld [vmem:[%s1200 + $0x78] sm:$0xff]
    %s1217 = scalar_lea.vmem %s9, 1
    %v1218 = vld [vmem:[%s1217] sm:$0x1]
    %v1220 = vlaneseq
    %v1221 = vshrl.u32 %v1220, 7
    %v1222 = vsub.s32 0, %v1221
    %v1223 = vrot.slane %v1218, %v1222
    %1225 = vmatprep.subr.mxu0 0.0
    %1226 = vmatpush1.msra.mxu0 %v1201
    %1227 = vmatprep.subr.mxu0 0.0
    %1228 = vmatpush1.msra.mxu0 %v1202
    %1229 = vmatprep.subr.mxu0 0.0
    %1230 = vmatpush1.msra.mxu0 %v1203
    %1231 = vmatprep.subr.mxu0 0.0
    %1232 = vmatpush1.msra.mxu0 %v1204
    %1233 = vmatprep.subr.mxu0 0.0
    %1234 = vmatpush1.msra.mxu0 %v1205
    %1235 = vmatprep.subr.mxu0 0.0
    %1236 = vmatpush1.msra.mxu0 %v1206
    %1237 = vmatprep.subr.mxu0 0.0
    %1238 = vmatpush1.msra.mxu0 %v1207
    %1239 = vmatprep.subr.mxu0 0.0
    %1240 = vmatpush1.msra.mxu0 %v1208
    %1241 = vmatprep.subr.mxu0 0.0
    %1242 = vmatpush1.msra.mxu0 %v1209
    %1243 = vmatprep.subr.mxu0 0.0
    %1244 = vmatpush1.msra.mxu0 %v1210
    %1245 = vmatprep.subr.mxu0 0.0
    %1246 = vmatpush1.msra.mxu0 %v1211
    %1247 = vmatprep.subr.mxu0 0.0
    %1248 = vmatpush1.msra.mxu0 %v1212
    %1249 = vmatprep.subr.mxu0 0.0
    %1250 = vmatpush1.msra.mxu0 %v1213
    %1251 = vmatprep.subr.mxu0 0.0
    %1252 = vmatpush1.msra.mxu0 %v1214
    %1253 = vmatprep.subr.mxu0 0.0
    %1254 = vmatpush1.msra.mxu0 %v1215
    %1255 = vmatprep.subr.mxu0 0.0
    %1256 = vmatpush1.msra.mxu0 %v1216
    %1257 = vmatprep.subr.mxu0 0.0
    %1258 = vmatpush1.msra.mxu0 0.0
    %1259 = vmatprep.subr.mxu0 0.0
    %1260 = vmatpush1.msra.mxu0 0.0
    %1261 = vmatprep.subr.mxu0 0.0
    %1262 = vmatpush1.msra.mxu0 0.0
    %1263 = vmatprep.subr.mxu0 0.0
    %1264 = vmatpush1.msra.mxu0 0.0
    %1265 = vmatprep.subr.mxu0 0.0
    %1266 = vmatpush1.msra.mxu0 0.0
    %1267 = vmatprep.subr.mxu0 0.0
    %1268 = vmatpush1.msra.mxu0 0.0
    %1269 = vmatprep.subr.mxu0 0.0
    %1270 = vmatpush1.msra.mxu0 0.0
    %1271 = vmatprep.subr.mxu0 0.0
    %1272 = vmatpush1.msra.mxu0 0.0
    %1273 = vmatprep.subr.mxu0 0.0
    %1274 = vmatpush1.msra.mxu0 0.0
    %1275 = vmatprep.subr.mxu0 0.0
    %1276 = vmatpush1.msra.mxu0 0.0
    %1277 = vmatprep.subr.mxu0 0.0
    %1278 = vmatpush1.msra.mxu0 0.0
    %1279 = vmatprep.subr.mxu0 0.0
    %1280 = vmatpush1.msra.mxu0 0.0
    %1281 = vmatprep.subr.mxu0 0.0
    %1282 = vmatpush1.msra.mxu0 0.0
    %1283 = vmatprep.subr.mxu0 0.0
    %1284 = vmatpush1.msra.mxu0 0.0
    %1285 = vmatprep.subr.mxu0 0.0
    %1286 = vmatpush1.msra.mxu0 0.0
    %1287 = vmatprep.subr.mxu0 0.0
    %1288 = vmatpush1.msra.mxu0 0.0
    %1289 = vmatprep.mubr.f32.mxu0 0.0
    %1290 = vmatmul.mubr.f32.gmra.mrb[0].mxu0 %v1186
    %v1291 = vpop.f32.mrb[0].mxu0
    %v1292 = vadd.f32 %v1223, %v1291
    %v1293 = vpop.f32.mrb[0].mxu0
    %1294 = vmatprep.mubr.f32.mxu0 0.0
    %1295 = vmatmul.mubr.f32.gmra.mrb[0].mxu0 %v1189
    %v1296 = vpop.f32.mrb[0].mxu0
    %v1297 = vadd.f32 %v1223, %v1296
    %v1298 = vpop.f32.mrb[0].mxu0
    %1299 = vmatprep.mubr.f32.mxu0 0.0
    %1300 = vmatmul.mubr.f32.gmra.mrb[0].mxu0 %v1194
    %v1301 = vpop.f32.mrb[0].mxu0
    %v1302 = vadd.f32 %v1223, %v1301
    %v1303 = vpop.f32.mrb[0].mxu0
    %1304 = vmatprep.mubr.f32.mxu0 0.0
    %1305 = vmatmul.mubr.f32.gmra.mrb[0].mxu0 %v1197
    %v1306 = vpop.f32.mrb[0].mxu0
    %v1307 = vadd.f32 %v1223, %v1306
    %v1308 = vpop.f32.mrb[0].mxu0
    %1309 = vdwg.mxu0
    %1310 = vmatprep.subr.mxu0 0.0
    %1311 = vmatpush1.msra.mxu0 %v1292
    %1312 = vmatprep.subr.mxu0 0.0
    %1313 = vmatpush1.msra.mxu0 %v1297
    %1314 = vmatprep.subr.mxu0 0.0
    %1315 = vmatpush1.msra.mxu0 %v1302
    %1316 = vmatprep.subr.mxu0 0.0
    %1317 = vmatpush1.msra.mxu0 %v1307
    %1318 = vmatprep.subr.mxu0 0.0
    %1319 = vmatpush1.msra.mxu0 0.0
    %1320 = vmatprep.subr.mxu0 0.0
    %1321 = vmatpush1.msra.mxu0 0.0
    %1322 = vmatprep.subr.mxu0 0.0
    %1323 = vmatpush1.msra.mxu0 0.0
    %1324 = vmatprep.subr.mxu0 0.0
    %1325 = vmatpush1.msra.mxu0 0.0
    %1326 = vmatprep.subr.mxu0 0.0
    %1327 = vmatpush1.msra.mxu0 0.0
    %1328 = vmatprep.subr.mxu0 0.0
    %1329 = vmatpush1.msra.mxu0 0.0
    %1330 = vmatprep.subr.mxu0 0.0
    %1331 = vmatpush1.msra.mxu0 0.0
    %1332 = vmatprep.subr.mxu0 0.0
    %1333 = vmatpush1.msra.mxu0 0.0
    %1334 = vmatprep.subr.mxu0 0.0
    %1335 = vmatpush1.msra.mxu0 0.0
    %1336 = vmatprep.subr.mxu0 0.0
    %1337 = vmatpush1.msra.mxu0 0.0
    %1338 = vmatprep.subr.mxu0 0.0
    %1339 = vmatpush1.msra.mxu0 0.0
    %1340 = vmatprep.subr.mxu0 0.0
    %1341 = vmatpush1.msra.mxu0 0.0
    %1342 = vmatprep.subr.mxu0 0.0
    %1343 = vmatpush1.msra.mxu0 0.0
    %1344 = vmatprep.subr.mxu0 0.0
    %1345 = vmatpush1.msra.mxu0 0.0
    %1346 = vmatprep.subr.mxu0 0.0
    %1347 = vmatpush1.msra.mxu0 0.0
    %1348 = vmatprep.subr.mxu0 0.0
    %1349 = vmatpush1.msra.mxu0 0.0
    %1350 = vmatprep.subr.mxu0 0.0
    %1351 = vmatpush1.msra.mxu0 0.0
    %1352 = vmatprep.subr.mxu0 0.0
    %1353 = vmatpush1.msra.mxu0 0.0
    %1354 = vmatprep.subr.mxu0 0.0
    %1355 = vmatpush1.msra.mxu0 0.0
    %1356 = vmatprep.subr.mxu0 0.0
    %1357 = vmatpush1.msra.mxu0 0.0
    %1358 = vmatprep.subr.mxu0 0.0
    %1359 = vmatpush1.msra.mxu0 0.0
    %1360 = vmatprep.subr.mxu0 0.0
    %1361 = vmatpush1.msra.mxu0 0.0
    %1362 = vmatprep.subr.mxu0 0.0
    %1363 = vmatpush1.msra.mxu0 0.0
    %1364 = vmatprep.subr.mxu0 0.0
    %1365 = vmatpush1.msra.mxu0 0.0
    %1366 = vmatprep.subr.mxu0 0.0
    %1367 = vmatpush1.msra.mxu0 0.0
    %1368 = vmatprep.subr.mxu0 0.0
    %1369 = vmatpush1.msra.mxu0 0.0
    %1370 = vmatprep.subr.mxu0 0.0
    %1371 = vmatpush1.msra.mxu0 0.0
    %1372 = vmatprep.subr.mxu0 0.0
    %1373 = vmatpush1.msra.mxu0 0.0
    %1374 = vmatprep.mubr.f32.mxu0 0.0
    %1375 = vmatmul.mubr.f32.gmra.mrb[0].mxu0 %v614
    %v1376 = vpop.f32.mrb[0].mxu0
    %v1377 = vadd.f32 0.0, %v1376
    %v1378 = vpop.f32.mrb[0].mxu0
    %1379 = vdwg.mxu0
    %v1380 = vmul.f32 %v1377, 0.03125
    %v1381 = vlaneseq
    %v1382 = vshrl.u32 %v1381, 7
    %v1383 = vsub.s32 0, %v1382
    %v1384 = vrot.slane %v1380, %v1383
    %v1385 = vsub.f32 %v1292, %v1384
    %v1386 = vsub.f32 %v1297, %v1384
    %v1387 = vsub.f32 %v1302, %v1384
    %v1388 = vsub.f32 %v1307, %v1384
    %v1389 = vmul.f32 %v1385, %v1385
    %v1390 = vmul.f32 %v1386, %v1386
    %v1391 = vmul.f32 %v1387, %v1387
    %v1392 = vmul.f32 %v1388, %v1388
    %1393 = vmatprep.subr.mxu0 0.0
    %1394 = vmatpush1.msra.mxu0 %v1389
    %1395 = vmatprep.subr.mxu0 0.0
    %1396 = vmatpush1.msra.mxu0 %v1390
    %1397 = vmatprep.subr.mxu0 0.0
    %1398 = vmatpush1.msra.mxu0 %v1391
    %1399 = vmatprep.subr.mxu0 0.0
    %1400 = vmatpush1.msra.mxu0 %v1392
    %1401 = vmatprep.subr.mxu0 0.0
    %1402 = vmatpush1.msra.mxu0 0.0
    %1403 = vmatprep.subr.mxu0 0.0
    %1404 = vmatpush1.msra.mxu0 0.0
    %1405 = vmatprep.subr.mxu0 0.0
    %1406 = vmatpush1.msra.mxu0 0.0
    %1407 = vmatprep.subr.mxu0 0.0
    %1408 = vmatpush1.msra.mxu0 0.0
    %1409 = vmatprep.subr.mxu0 0.0
    %1410 = vmatpush1.msra.mxu0 0.0
    %1411 = vmatprep.subr.mxu0 0.0
    %1412 = vmatpush1.msra.mxu0 0.0
    %1413 = vmatprep.subr.mxu0 0.0
    %1414 = vmatpush1.msra.mxu0 0.0
    %1415 = vmatprep.subr.mxu0 0.0
    %1416 = vmatpush1.msra.mxu0 0.0
    %1417 = vmatprep.subr.mxu0 0.0
    %1418 = vmatpush1.msra.mxu0 0.0
    %1419 = vmatprep.subr.mxu0 0.0
    %1420 = vmatpush1.msra.mxu0 0.0
    %1421 = vmatprep.subr.mxu0 0.0
    %1422 = vmatpush1.msra.mxu0 0.0
    %1423 = vmatprep.subr.mxu0 0.0
    %1424 = vmatpush1.msra.mxu0 0.0
    %1425 = vmatprep.subr.mxu0 0.0
    %1426 = vmatpush1.msra.mxu0 0.0
    %1427 = vmatprep.subr.mxu0 0.0
    %1428 = vmatpush1.msra.mxu0 0.0
    %1429 = vmatprep.subr.mxu0 0.0
    %1430 = vmatpush1.msra.mxu0 0.0
    %1431 = vmatprep.subr.mxu0 0.0
    %1432 = vmatpush1.msra.mxu0 0.0
    %1433 = vmatprep.subr.mxu0 0.0
    %1434 = vmatpush1.msra.mxu0 0.0
    %1435 = vmatprep.subr.mxu0 0.0
    %1436 = vmatpush1.msra.mxu0 0.0
    %1437 = vmatprep.subr.mxu0 0.0
    %1438 = vmatpush1.msra.mxu0 0.0
    %1439 = vmatprep.subr.mxu0 0.0
    %1440 = vmatpush1.msra.mxu0 0.0
    %1441 = vmatprep.subr.mxu0 0.0
    %1442 = vmatpush1.msra.mxu0 0.0
    %1443 = vmatprep.subr.mxu0 0.0
    %1444 = vmatpush1.msra.mxu0 0.0
    %1445 = vmatprep.subr.mxu0 0.0
    %1446 = vmatpush1.msra.mxu0 0.0
    %1447 = vmatprep.subr.mxu0 0.0
    %1448 = vmatpush1.msra.mxu0 0.0
    %1449 = vmatprep.subr.mxu0 0.0
    %1450 = vmatpush1.msra.mxu0 0.0
    %1451 = vmatprep.subr.mxu0 0.0
    %1452 = vmatpush1.msra.mxu0 0.0
    %1453 = vmatprep.subr.mxu0 0.0
    %1454 = vmatpush1.msra.mxu0 0.0
    %1455 = vmatprep.subr.mxu0 0.0
    %1456 = vmatpush1.msra.mxu0 0.0
    %1457 = vmatprep.mubr.f32.mxu0 0.0
    %1458 = vmatmul.mubr.f32.gmra.mrb[0].mxu0 %v614
    %v1459 = vpop.f32.mrb[0].mxu0
    %v1460 = vadd.f32 0.0, %v1459
    %v1461 = vpop.f32.mrb[0].mxu0
    %1462 = vdwg.mxu0
    %v1463 = vmul.f32 %v1460, 0.03125
    %v1464 = vadd.f32 %v1463, 1e-05
    %v1465 = vrsqrt.pop %v1464
    %v1466 = vlaneseq
    %v1467 = vshrl.u32 %v1466, 7
    %v1468 = vsub.s32 0, %v1467
    %v1469 = vrot.slane %v1465, %v1468
    %v1470 = vmul.f32 %v1385, %v1469
    %v1471 = vmul.f32 %v1386, %v1469
    %v1472 = vmul.f32 %v1387, %v1469
    %v1473 = vmul.f32 %v1388, %v1469
    %s1474 = scalar_lea.vmem %s10, 1
    %v1475 = vld [vmem:[%s1474] sm:$0x1]
    %v1477 = vlaneseq
    %v1478 = vshrl.u32 %v1477, 7
    %v1479 = vsub.s32 0, %v1478
    %v1480 = vrot.slane %v1475, %v1479
    %v1482 = vmul.f32 %v1470, %v1480
    %v1483 = vmul.f32 %v1471, %v1480
    %v1484 = vmul.f32 %v1472, %v1480
    %v1485 = vmul.f32 %v1473, %v1480
    %s1486 = scalar_lea.vmem %s11, 1
    %v1487 = vld [vmem:[%s1486] sm:$0x1]
    %v1489 = vlaneseq
    %v1490 = vshrl.u32 %v1489, 7
    %v1491 = vsub.s32 0, %v1490
    %v1492 = vrot.slane %v1487, %v1491
    %v1494 = vadd.f32 %v1482, %v1492
    %v1495 = vadd.f32 %v1483, %v1492
    %v1496 = vadd.f32 %v1484, %v1492
    %v1497 = vadd.f32 %v1485, %v1492
    %v1498 = vmax.f32 %v1494, 0.0
    %v1499 = vmax.f32 %v1495, 0.0
    %v1500 = vmax.f32 %v1496, 0.0
    %v1501 = vmax.f32 %v1497, 0.0
    %s1502 = scalar_lea.vmem [#allocation7], 128
    %v1503 = vld [vmem:[%s1502] sm:$0xff]
    %v1504 = vld [vmem:[%s1502 + $0x8] sm:$0xff]
    %v1505 = vld [vmem:[%s1502 + $0x10] sm:$0xff]
    %v1506 = vld [vmem:[%s1502 + $0x18] sm:$0xff]
    %v1507 = vld [vmem:[%s1502 + $0x20] sm:$0xff]
    %v1508 = vld [vmem:[%s1502 + $0x28] sm:$0xff]
    %v1509 = vld [vmem:[%s1502 + $0x30] sm:$0xff]
    %v1510 = vld [vmem:[%s1502 + $0x38] sm:$0xff]
    %v1511 = vld [vmem:[%s1502 + $0x40] sm:$0xff]
    %v1512 = vld [vmem:[%s1502 + $0x48] sm:$0xff]
    %v1513 = vld [vmem:[%s1502 + $0x50] sm:$0xff]
    %v1514 = vld [vmem:[%s1502 + $0x58] sm:$0xff]
    %v1515 = vld [vmem:[%s1502 + $0x60] sm:$0xff]
    %v1516 = vld [vmem:[%s1502 + $0x68] sm:$0xff]
    %v1517 = vld [vmem:[%s1502 + $0x70] sm:$0xff]
    %v1518 = vld [vmem:[%s1502 + $0x78] sm:$0xff]
    %s1519 = scalar_lea.vmem %s13, 1
    %v1520 = vld [vmem:[%s1519] sm:$0x1]
    %v1522 = vlaneseq
    %v1523 = vshrl.u32 %v1522, 7
    %v1524 = vsub.s32 0, %v1523
    %v1525 = vrot.slane %v1520, %v1524
    %1527 = vmatprep.subr.mxu0 0.0
    %1528 = vmatpush1.msra.mxu0 %v1503
    %1529 = vmatprep.subr.mxu0 0.0
    %1530 = vmatpush1.msra.mxu0 %v1504
    %1531 = vmatprep.subr.mxu0 0.0
    %1532 = vmatpush1.msra.mxu0 %v1505
    %1533 = vmatprep.subr.mxu0 0.0
    %1534 = vmatpush1.msra.mxu0 %v1506
    %1535 = vmatprep.subr.mxu0 0.0
    %1536 = vmatpush1.msra.mxu0 %v1507
    %1537 = vmatprep.subr.mxu0 0.0
    %1538 = vmatpush1.msra.mxu0 %v1508
    %1539 = vmatprep.subr.mxu0 0.0
    %1540 = vmatpush1.msra.mxu0 %v1509
    %1541 = vmatprep.subr.mxu0 0.0
    %1542 = vmatpush1.msra.mxu0 %v1510
    %1543 = vmatprep.subr.mxu0 0.0
    %1544 = vmatpush1.msra.mxu0 %v1511
    %1545 = vmatprep.subr.mxu0 0.0
    %1546 = vmatpush1.msra.mxu0 %v1512
    %1547 = vmatprep.subr.mxu0 0.0
    %1548 = vmatpush1.msra.mxu0 %v1513
    %1549 = vmatprep.subr.mxu0 0.0
    %1550 = vmatpush1.msra.mxu0 %v1514
    %1551 = vmatprep.subr.mxu0 0.0
    %1552 = vmatpush1.msra.mxu0 %v1515
    %1553 = vmatprep.subr.mxu0 0.0
    %1554 = vmatpush1.msra.mxu0 %v1516
    %1555 = vmatprep.subr.mxu0 0.0
    %1556 = vmatpush1.msra.mxu0 %v1517
    %1557 = vmatprep.subr.mxu0 0.0
    %1558 = vmatpush1.msra.mxu0 %v1518
    %1559 = vmatprep.subr.mxu0 0.0
    %1560 = vmatpush1.msra.mxu0 0.0
    %1561 = vmatprep.subr.mxu0 0.0
    %1562 = vmatpush1.msra.mxu0 0.0
    %1563 = vmatprep.subr.mxu0 0.0
    %1564 = vmatpush1.msra.mxu0 0.0
    %1565 = vmatprep.subr.mxu0 0.0
    %1566 = vmatpush1.msra.mxu0 0.0
    %1567 = vmatprep.subr.mxu0 0.0
    %1568 = vmatpush1.msra.mxu0 0.0
    %1569 = vmatprep.subr.mxu0 0.0
    %1570 = vmatpush1.msra.mxu0 0.0
    %1571 = vmatprep.subr.mxu0 0.0
    %1572 = vmatpush1.msra.mxu0 0.0
    %1573 = vmatprep.subr.mxu0 0.0
    %1574 = vmatpush1.msra.mxu0 0.0
    %1575 = vmatprep.subr.mxu0 0.0
    %1576 = vmatpush1.msra.mxu0 0.0
    %1577 = vmatprep.subr.mxu0 0.0
    %1578 = vmatpush1.msra.mxu0 0.0
    %1579 = vmatprep.subr.mxu0 0.0
    %1580 = vmatpush1.msra.mxu0 0.0
    %1581 = vmatprep.subr.mxu0 0.0
    %1582 = vmatpush1.msra.mxu0 0.0
    %1583 = vmatprep.subr.mxu0 0.0
    %1584 = vmatpush1.msra.mxu0 0.0
    %1585 = vmatprep.subr.mxu0 0.0
    %1586 = vmatpush1.msra.mxu0 0.0
    %1587 = vmatprep.subr.mxu0 0.0
    %1588 = vmatpush1.msra.mxu0 0.0
    %1589 = vmatprep.subr.mxu0 0.0
    %1590 = vmatpush1.msra.mxu0 0.0
    %1591 = vmatprep.mubr.f32.mxu0 0.0
    %1592 = vmatmul.mubr.f32.gmra.mrb[0].mxu0 %v1498
    %v1593 = vpop.f32.mrb[0].mxu0
    %v1594 = vadd.f32 %v1525, %v1593
    %v1595 = vpop.f32.mrb[0].mxu0
    %1596 = vmatprep.mubr.f32.mxu0 0.0
    %1597 = vmatmul.mubr.f32.gmra.mrb[0].mxu0 %v1499
    %v1598 = vpop.f32.mrb[0].mxu0
    %v1599 = vadd.f32 %v1525, %v1598
    %v1600 = vpop.f32.mrb[0].mxu0
    %1601 = vmatprep.mubr.f32.mxu0 0.0
    %1602 = vmatmul.mubr.f32.gmra.mrb[0].mxu0 %v1500
    %v1603 = vpop.f32.mrb[0].mxu0
    %v1604 = vadd.f32 %v1525, %v1603
    %v1605 = vpop.f32.mrb[0].mxu0
    %1606 = vmatprep.mubr.f32.mxu0 0.0
    %1607 = vmatmul.mubr.f32.gmra.mrb[0].mxu0 %v1501
    %v1608 = vpop.f32.mrb[0].mxu0
    %v1609 = vadd.f32 %v1525, %v1608
    %v1610 = vpop.f32.mrb[0].mxu0
    %1611 = vdwg.mxu0
    %v1612 = vmax.f32 %v1594, 0.0
    %v1613 = vmax.f32 %v1599, 0.0
    %v1614 = vmax.f32 %v1604, 0.0
    %v1615 = vmax.f32 %v1609, 0.0
    %s1616 = scalar_lea.vmem %s14, 1
    %v1617 = vld [vmem:[%s1616] sm:$0x1]
    %v1619 = vlaneseq
    %v1620 = vshrl.u32 %v1619, 7
    %v1621 = vsub.s32 0, %v1620
    %v1622 = vrot.slane %v1617, %v1621
    %v1624 = vmul.f32 %v1612, %v1622
    %v1625 = vmul.f32 %v1613, %v1622
    %v1626 = vmul.f32 %v1614, %v1622
    %v1627 = vmul.f32 %v1615, %v1622
    %s1628 = scalar_lea.vmem %s15, 1
    %v1629 = vld [vmem:[%s1628] sm:$0x1]
    %v1631 = vlaneseq
    %v1632 = vshrl.u32 %v1631, 7
    %v1633 = vsub.s32 0, %v1632
    %v1634 = vrot.slane %v1629, %v1633
    %v1636 = vadd.f32 %v1624, %v1634
    %v1637 = vadd.f32 %v1625, %v1634
    %v1638 = vadd.f32 %v1626, %v1634
    %v1639 = vadd.f32 %v1627, %v1634
    %v1640 = vadd.f32 %v1636, %v944
    %v1641 = vadd.f32 %v1637, %v945
    %v1642 = vadd.f32 %v1638, %v946
    %v1643 = vadd.f32 %v1639, %v947
    %v1644 = vpack.c.bf16 %v1641, %v1640
    %v1645 = vpack.c.bf16 %v1643, %v1642
    %v1647 = vsel %vm353, %v196, 0
    %1649 = vmatprep.subr.bf16.mxu0 0
    %1650 = vmatpush1.bf16.msra.mxu0 %v1644
    %1651 = vmatprep.subr.bf16.mxu0 0
    %1652 = vmatpush1.bf16.msra.mxu0 %v1645
    %1653 = vmatprep.subr.bf16.mxu0 0
    %1654 = vmatpush1.bf16.msra.mxu0 0
    %1655 = vmatprep.subr.bf16.mxu0 0
    %1656 = vmatpush1.bf16.msra.mxu0 0
    %1657 = vmatprep.subr.bf16.mxu0 0
    %1658 = vmatpush1.bf16.msra.mxu0 0
    %1659 = vmatprep.subr.bf16.mxu0 0
    %1660 = vmatpush1.bf16.msra.mxu0 0
    %1661 = vmatprep.subr.bf16.mxu0 0
    %1662 = vmatpush1.bf16.msra.mxu0 0
    %1663 = vmatprep.subr.bf16.mxu0 0
    %1664 = vmatpush1.bf16.msra.mxu0 0
    %1665 = vmatprep.subr.bf16.mxu0 0
    %1666 = vmatpush1.bf16.msra.mxu0 0
    %1667 = vmatprep.subr.bf16.mxu0 0
    %1668 = vmatpush1.bf16.msra.mxu0 0
    %1669 = vmatprep.subr.bf16.mxu0 0
    %1670 = vmatpush1.bf16.msra.mxu0 0
    %1671 = vmatprep.subr.bf16.mxu0 0
    %1672 = vmatpush1.bf16.msra.mxu0 0
    %1673 = vmatprep.subr.bf16.mxu0 0
    %1674 = vmatpush1.bf16.msra.mxu0 0
    %1675 = vmatprep.subr.bf16.mxu0 0
    %1676 = vmatpush1.bf16.msra.mxu0 0
    %1677 = vmatprep.subr.bf16.mxu0 0
    %1678 = vmatpush1.bf16.msra.mxu0 0
    %1679 = vmatprep.subr.bf16.mxu0 0
    %1680 = vmatpush1.bf16.msra.mxu0 0
    %1681 = vmatprep.mubr.bf16.mxu0 0
    %1682 = vmatmul.mubr.bf16.gmra.mrb[0].mxu0 %v1647
    %v1683 = vpop.f32.mrb[0].mxu0
    %v1684 = vadd.f32 0.0, %v1683
    %v1685 = vpop.f32.mrb[0].mxu0
    %v1686 = vpop.f32.mrb[0].mxu0
    %v1687 = vpop.f32.mrb[0].mxu0
    %1688 = vdwg.mxu0
    %v1689 = vld [vmem:[%s16] sm:$0xff]
    %v1690 = vld [vmem:[%s16 + $0x8] sm:$0xff]
    %v1691 = vld [vmem:[%s16 + $0x10] sm:$0xff]
    %v1692 = vld [vmem:[%s16 + $0x18] sm:$0xff]
    %v1693 = vld [vmem:[%s16 + $0x20] sm:$0xff]
    %v1694 = vld [vmem:[%s16 + $0x28] sm:$0xff]
    %v1695 = vld [vmem:[%s16 + $0x30] sm:$0xff]
    %v1696 = vld [vmem:[%s16 + $0x38] sm:$0xff]
    %v1697 = vld [vmem:[%s16 + $0x40] sm:$0xff]
    %v1698 = vld [vmem:[%s16 + $0x48] sm:$0xff]
    %v1699 = vld [vmem:[%s16 + $0x50] sm:$0xff]
    %v1700 = vld [vmem:[%s16 + $0x58] sm:$0xff]
    %v1701 = vld [vmem:[%s16 + $0x60] sm:$0xff]
    %v1702 = vld [vmem:[%s16 + $0x68] sm:$0xff]
    %v1703 = vld [vmem:[%s16 + $0x70] sm:$0xff]
    %v1704 = vld [vmem:[%s16 + $0x78] sm:$0xff]
    %v1705 = vld [vmem:[%s17] sm:$0x1]
    %v1707 = vlaneseq
    %v1708 = vshrl.u32 %v1707, 7
    %v1709 = vsub.s32 0, %v1708
    %v1710 = vrot.slane %v1705, %v1709
    %1712 = vmatprep.subr.mxu0 0.0
    %1713 = vmatpush1.msra.mxu0 %v1689
    %1714 = vmatprep.subr.mxu0 0.0
    %1715 = vmatpush1.msra.mxu0 %v1690
    %1716 = vmatprep.subr.mxu0 0.0
    %1717 = vmatpush1.msra.mxu0 %v1691
    %1718 = vmatprep.subr.mxu0 0.0
    %1719 = vmatpush1.msra.mxu0 %v1692
    %1720 = vmatprep.subr.mxu0 0.0
    %1721 = vmatpush1.msra.mxu0 %v1693
    %1722 = vmatprep.subr.mxu0 0.0
    %1723 = vmatpush1.msra.mxu0 %v1694
    %1724 = vmatprep.subr.mxu0 0.0
    %1725 = vmatpush1.msra.mxu0 %v1695
    %1726 = vmatprep.subr.mxu0 0.0
    %1727 = vmatpush1.msra.mxu0 %v1696
    %1728 = vmatprep.subr.mxu0 0.0
    %1729 = vmatpush1.msra.mxu0 %v1697
    %1730 = vmatprep.subr.mxu0 0.0
    %1731 = vmatpush1.msra.mxu0 %v1698
    %1732 = vmatprep.subr.mxu0 0.0
    %1733 = vmatpush1.msra.mxu0 %v1699
    %1734 = vmatprep.subr.mxu0 0.0
    %1735 = vmatpush1.msra.mxu0 %v1700
    %1736 = vmatprep.subr.mxu0 0.0
    %1737 = vmatpush1.msra.mxu0 %v1701
    %1738 = vmatprep.subr.mxu0 0.0
    %1739 = vmatpush1.msra.mxu0 %v1702
    %1740 = vmatprep.subr.mxu0 0.0
    %1741 = vmatpush1.msra.mxu0 %v1703
    %1742 = vmatprep.subr.mxu0 0.0
    %1743 = vmatpush1.msra.mxu0 %v1704
    %1744 = vmatprep.subr.mxu0 0.0
    %1745 = vmatpush1.msra.mxu0 0.0
    %1746 = vmatprep.subr.mxu0 0.0
    %1747 = vmatpush1.msra.mxu0 0.0
    %1748 = vmatprep.subr.mxu0 0.0
    %1749 = vmatpush1.msra.mxu0 0.0
    %1750 = vmatprep.subr.mxu0 0.0
    %1751 = vmatpush1.msra.mxu0 0.0
    %1752 = vmatprep.subr.mxu0 0.0
    %1753 = vmatpush1.msra.mxu0 0.0
    %1754 = vmatprep.subr.mxu0 0.0
    %1755 = vmatpush1.msra.mxu0 0.0
    %1756 = vmatprep.subr.mxu0 0.0
    %1757 = vmatpush1.msra.mxu0 0.0
    %1758 = vmatprep.subr.mxu0 0.0
    %1759 = vmatpush1.msra.mxu0 0.0
    %1760 = vmatprep.subr.mxu0 0.0
    %1761 = vmatpush1.msra.mxu0 0.0
    %1762 = vmatprep.subr.mxu0 0.0
    %1763 = vmatpush1.msra.mxu0 0.0
    %1764 = vmatprep.subr.mxu0 0.0
    %1765 = vmatpush1.msra.mxu0 0.0
    %1766 = vmatprep.subr.mxu0 0.0
    %1767 = vmatpush1.msra.mxu0 0.0
    %1768 = vmatprep.subr.mxu0 0.0
    %1769 = vmatpush1.msra.mxu0 0.0
    %1770 = vmatprep.subr.mxu0 0.0
    %1771 = vmatpush1.msra.mxu0 0.0
    %1772 = vmatprep.subr.mxu0 0.0
    %1773 = vmatpush1.msra.mxu0 0.0
    %1774 = vmatprep.subr.mxu0 0.0
    %1775 = vmatpush1.msra.mxu0 0.0
    %1776 = vmatprep.mubr.f32.mxu0 0.0
    %1777 = vmatmul.mubr.f32.gmra.mrb[0].mxu0 %v1684
    %v1778 = vpop.f32.mrb[0].mxu0
    %v1779 = vadd.f32 %v1710, %v1778
    %v1780 = vpop.f32.mrb[0].mxu0
    %1781 = vdwg.mxu0
    %v1782 = vmax.f32 %v1779, 0.0
    %v1783 = vmin.f32 %v1782, 50.0
    %1784 = vst [vmem:[#allocation9] sm:$0x3] %v1783
    // Predicated region
    $region86: #{tpu_custom_call.1} parent=1 // pred_check
      _
    $region87: #{tpu_custom_call.1} parent=1 // pred_check_branch
      %1786 = sbr.rel (0) target = $region89
    $region88: #{tpu_custom_call.1} parent=1 // pred_region
      %s1788 = ssub.s32 32, 32
      %1789 = vsyncadd [#allocation4], %s1788
      %s1791 = sshll.u32 [#allocation9], 4
      %s1792 = int_to_ptr.vmem [resolvable:$true] %s1791
      %1794 = dma.vmem_to_hbm [thread:$0]  %s1792, 32, %s18, [#allocation4]
    $region89: #{tpu_custom_call.1} parent=1 // pred_fallthru
      _
    // Predicated region
    $region90: #{tpu_custom_call.1} parent=1 // pred_check
      _
    $region91: #{tpu_custom_call.1} parent=1 // pred_check_branch
      %1796 = sbr.rel (0) target = $region93
    $region92: #{tpu_custom_call.1} parent=1 // pred_region
      %1797 = dma.done [#allocation4], 32
    $region93: #{tpu_custom_call.1} parent=1 // pred_fallthru
      _
    %1798 = vsyncpa [#allocation3], 1
    %1799 = vsyncpa [#allocation8], 1
    %1800 = vsyncpa [#allocation4], 1
    %1801 = vsyncpa [#allocation5], 1

</llo_original>
